<compile_context>
chip_gen: v7x
topology: tpu7x:2x2x1
jax: 0.10.0
libtpu: 0.0.40
codegen_flags: <defaults>
</compile_context>

<pallas_src>
import jax
import jax.numpy as jnp
from jax.experimental import pallas as pl
from jax.experimental.pallas import tpu as pltpu

K = 7                     # conv kernel size
PAD = (K - 1) // 2        # 3

_VMEM_LIMIT_BYTES = 48 * 1024 * 1024    # stays inside v7x's 64 MiB physical VMEM
_BLOCK_BUDGET_BYTES = 24 * 1024 * 1024  # budget for double-buffered blocks


def _divisors_desc(n):
    return [d for d in range(n, 0, -1) if n % d == 0]


def _pick_batch_tile(n, per_image_bytes, budget=_BLOCK_BUDGET_BYTES, max_tile=None):
    """Largest batch tile nb that divides n, keeps >= 2 grid steps when n >= 2
    (so both v7x TensorCores / megacore halves get work) and whose
    double-buffered blocks fit the VMEM budget."""
    for nb in _divisors_desc(n):
        if max_tile is not None and nb > max_tile:
            continue
        if n >= 2 and n // nb < 2:
            continue
        if 2 * nb * per_image_bytes <= budget:
            return nb
    return 1


def _pick_channel_tile(c, hw, nb, x_bytes, budget=_BLOCK_BUDGET_BYTES):
    """Channel tile for kernel 2 (VMEM guard for large C on v7x).  ct == c
    unless the full-channel block overflows the budget and C is 8-divisible."""
    per_step = 2 * nb * (2 * c * x_bytes + 4) * hw
    if per_step <= budget or c % 8 != 0:
        return c
    for ct in _divisors_desc(c):
        if ct % 8:
            continue
        if 2 * nb * (2 * ct * x_bytes + 4) * hw <= budget:
            return ct
    return 8


def pool_conv_kernel(w_ref, xp_ref, s_ref):
    # w_ref : (2*K*K,) f32 SMEM  flattened OIHW conv weight; the mean-channel
    #                            taps are pre-scaled by 1/C (so pool uses sum).
    # xp_ref: (nb, C, Hp, Wp)    zero-padded input tile (VMEM).
    # s_ref : (nb, H, W) f32     conv output tile (VMEM).
    nb, H, W = s_ref.shape
    C = xp_ref.shape[1]
    Wp = xp_ref.shape[3]

    # Channel pool kept as register values; each input element is read from
    # VMEM exactly once (no scratch, no re-reads).
    mx = xp_ref[:, 0, :, :].astype(jnp.float32)          # (nb, Hp, Wp)
    sm = mx
    for ci in range(1, C):
        ch = xp_ref[:, ci, :, :].astype(jnp.float32)
        mx = jnp.maximum(mx, ch)
        sm = sm + ch

    # 2-in-channel 7x7 cross-correlation, fully unrolled (98 taps), on
    # in-register values only.  dy -> hoisted static sublane slices (14 total);
    # dx -> folded into K per-offset accumulators so only K lane shifts (XLU)
    # happen at the end, instead of 98 lane-misaligned VMEM reads.
    accs = [jnp.zeros((nb, H, Wp), jnp.float32) for _ in range(K)]
    for c, cp in enumerate((mx, sm)):
        for dy in range(K):
            slab = cp[:, dy:dy + H, :]                   # (nb, H, Wp)
            for dx in range(K):
                w = w_ref[c * K * K + dy * K + dx]       # scalar from SMEM
                accs[dx] = accs[dx] + w * slab

    out = accs[0][:, :, 0:W]
    for dx in range(1, K):
        out = out + accs[dx][:, :, dx:dx + W]            # lane shift (XLU)
    s_ref[...] = out


def apply_kernel(sb_ref, x_ref, s_ref, o_ref):
    # sb_ref: (2,) f32 SMEM   [bn_scale, bn_shift]
    # x_ref : (nb, ct, HW)    input tile, spatial dims flattened onto lanes
    # s_ref : (nb, 1, HW) f32 conv output for the same images
    # o_ref : (nb, ct, HW)    x * sigmoid(bn(conv(channelpool(x))))
    attn = jax.nn.sigmoid(s_ref[...] * sb_ref[0] + sb_ref[1])   # (nb, 1, HW)
    # f32 compute (safe on v5e); I/O stays in x/o dtype (bf16-friendly on v6e+).
    o_ref[...] = (x_ref[...].astype(jnp.float32) * attn).astype(o_ref.dtype)


def spatial_attention(x, conv_w, gamma, beta, eps=1e-5):
    """Pallas implementation of Spatial_Attention.forward (training-mode BN)."""
    N, C, H, W = x.shape
    HW = H * W
    Hp, Wp = H + 2 * PAD, W + 2 * PAD
    x_bytes = jnp.dtype(x.dtype).itemsize

    # Glue: spatial zero-padding (equivalent to padding the pooled map).
    x_pad = jnp.pad(x, ((0, 0), (0, 0), (PAD, PAD), (PAD, PAD)))

    # Fold the channel-mean's 1/C into the second input channel's taps.
    w = conv_w.reshape(2, K, K).astype(jnp.float32)
    w = w * jnp.array([1.0, 1.0 / C], jnp.float32)[:, None, None]
    w_flat = w.reshape(-1)                                      # (2*K*K,)

    # ---- Kernel 1: fused ChannelPool + 7x7 conv (bias=False) --------------
    k1_per_image = C * Hp * Wp * x_bytes + H * W * 4
    nb1 = _pick_batch_tile(N, k1_per_image, max_tile=8)
    s = pl.pallas_call(
        pool_conv_kernel,
        out_shape=jax.ShapeDtypeStruct((N, H, W), jnp.float32),
        grid=(N // nb1,),
        in_specs=[
            pl.BlockSpec(memory_space=pltpu.MemorySpace.SMEM),
            pl.BlockSpec((nb1, C, Hp, Wp), lambda b: (b, 0, 0, 0)),
        ],
        out_specs=pl.BlockSpec((nb1, H, W), lambda b: (b, 0, 0)),
        compiler_params=pltpu.CompilerParams(
            dimension_semantics=("parallel",),
            vmem_limit_bytes=_VMEM_LIMIT_BYTES),
    )(w_flat, x_pad)

    # BatchNorm2d(1) forward semantics for a freshly-constructed module
    # (training mode): batch statistics with biased variance.  s is tiny
    # (N*H*W scalars), so this global reduction stays in plain-JAX glue.
    mean = jnp.mean(s)
    var = jnp.mean((s - mean) ** 2)
    bn_scale = gamma / jnp.sqrt(var + eps)
    bn_shift = beta - mean * bn_scale
    sb = jnp.stack([bn_scale, bn_shift]).astype(jnp.float32)    # (2,)

    # ---- Kernel 2: sigmoid(bn(s)) * x, lane-dense flattened spatial -------
    x2 = x.reshape(N, C, HW)         # last (lane) axis = H*W -> unmasked vst
    s2 = s.reshape(N, 1, HW)
    k2_per_image = (2 * C * x_bytes + 4) * HW
    nb2 = _pick_batch_tile(N, k2_per_image)
    ct = _pick_channel_tile(C, HW, nb2, x_bytes)
    out = pl.pallas_call(
        apply_kernel,
        out_shape=jax.ShapeDtypeStruct((N, C, HW), x.dtype),
        grid=(N // nb2, C // ct),
        in_specs=[
            pl.BlockSpec(memory_space=pltpu.MemorySpace.SMEM),
            pl.BlockSpec((nb2, ct, HW), lambda b, c: (b, c, 0)),
            pl.BlockSpec((nb2, 1, HW), lambda b, c: (b, 0, 0)),
        ],
        out_specs=pl.BlockSpec((nb2, ct, HW), lambda b, c: (b, c, 0)),
        compiler_params=pltpu.CompilerParams(
            dimension_semantics=("parallel", "parallel"),
            vmem_limit_bytes=_VMEM_LIMIT_BYTES),
    )(sb, x2, s2)
    return out.reshape(N, C, H, W)


def spatial_attention_ref(x, conv_w, gamma, beta, eps=1e-5):
    """Pure-JAX reference (mirrors the PyTorch forward)."""
    mx = jnp.max(x, axis=1, keepdims=True)
    mn = jnp.mean(x, axis=1, keepdims=True)
    cp = jnp.concatenate([mx, mn], axis=1)                      # (N, 2, H, W)
    s = jax.lax.conv_general_dilated(
        cp, conv_w, window_strides=(1, 1),
        padding=[(PAD, PAD), (PAD, PAD)],
        dimension_numbers=("NCHW", "OIHW", "NCHW"))             # (N, 1, H, W)
    mean = jnp.mean(s)
    var = jnp.mean((s - mean) ** 2)
    s_hat = (s - mean) / jnp.sqrt(var + eps) * gamma + beta
    return x * jax.nn.sigmoid(s_hat)


if __name__ == "__main__":
    key = jax.random.PRNGKey(0)
    kx, kw = jax.random.split(key)

    N, C, H, W = 2, 4, 16, 16
    x = jax.random.normal(kx, (N, C, H, W), dtype=jnp.float32)

    # Conv2d(2, 1, 7, bias=False) weight, deterministic kaiming-uniform-like init.
    fan_in = 2 * K * K
    bound = (1.0 / fan_in) ** 0.5
    conv_w = jax.random.uniform(kw, (1, 2, K, K), dtype=jnp.float32,
                                minval=-bound, maxval=bound)
    # BatchNorm2d(1) default affine init.
    gamma = jnp.float32(1.0)
    beta = jnp.float32(0.0)

    out = jax.block_until_ready(spatial_attention(x, conv_w, gamma, beta))

    ref = spatial_attention_ref(x, conv_w, gamma, beta)
    assert out.shape == (N, C, H, W)
    err = jnp.max(jnp.abs(out - ref))
    assert jnp.allclose(out, ref, rtol=1e-4, atol=1e-4), f"max abs err {err}"

    print("KERNEL_OK")
</pallas_src>

<mosaic_0001>
module attributes {stable_mosaic.version = 11 : i64} {
  func.func @pool_conv_kernel(%arg0: i32, %arg1: memref<98xf32, #tpu.memory_space<smem>>, %arg2: memref<1x4x22x22xf32, #tpu.memory_space<vmem>>, %arg3: memref<1x16x16xf32, #tpu.memory_space<vmem>>) attributes {dimension_semantics = [#tpu.dimension_semantics<parallel>], iteration_bounds = array<i64: 2>, scalar_prefetch = 0 : i64, scratch_operands = 0 : i64, tpu.core_type = #tpu.core_type<tc>, window_params = [{transform_indices = @transform_0, window_bounds = array<i64: 98>}, {transform_indices = @transform_1, window_bounds = array<i64: 1, 4, 22, 22>}, {transform_indices = @transform_2, window_bounds = array<i64: 1, 16, 16>}]} {
    %c0 = arith.constant 0 : index
    %c0_0 = arith.constant 0 : index
    %c0_1 = arith.constant 0 : index
    %c0_2 = arith.constant 0 : index
    %0 = vector.load %arg2[%c0, %c0_0, %c0_1, %c0_2] : memref<1x4x22x22xf32, #tpu.memory_space<vmem>>, vector<1x1x22x22xf32>
    %1 = vector.shape_cast %0 : vector<1x1x22x22xf32> to vector<1x22x22xf32>
    %c0_3 = arith.constant 0 : index
    %c1 = arith.constant 1 : index
    %c0_4 = arith.constant 0 : index
    %c0_5 = arith.constant 0 : index
    %2 = vector.load %arg2[%c0_3, %c1, %c0_4, %c0_5] : memref<1x4x22x22xf32, #tpu.memory_space<vmem>>, vector<1x1x22x22xf32>
    %3 = vector.shape_cast %2 : vector<1x1x22x22xf32> to vector<1x22x22xf32>
    %4 = arith.maximumf %1, %3 : vector<1x22x22xf32>
    %5 = arith.addf %1, %3 : vector<1x22x22xf32>
    %c0_6 = arith.constant 0 : index
    %c2 = arith.constant 2 : index
    %c0_7 = arith.constant 0 : index
    %c0_8 = arith.constant 0 : index
    %6 = vector.load %arg2[%c0_6, %c2, %c0_7, %c0_8] : memref<1x4x22x22xf32, #tpu.memory_space<vmem>>, vector<1x1x22x22xf32>
    %7 = vector.shape_cast %6 : vector<1x1x22x22xf32> to vector<1x22x22xf32>
    %8 = arith.maximumf %4, %7 : vector<1x22x22xf32>
    %9 = arith.addf %5, %7 : vector<1x22x22xf32>
    %c0_9 = arith.constant 0 : index
    %c3 = arith.constant 3 : index
    %c0_10 = arith.constant 0 : index
    %c0_11 = arith.constant 0 : index
    %10 = vector.load %arg2[%c0_9, %c3, %c0_10, %c0_11] : memref<1x4x22x22xf32, #tpu.memory_space<vmem>>, vector<1x1x22x22xf32>
    %11 = vector.shape_cast %10 : vector<1x1x22x22xf32> to vector<1x22x22xf32>
    %12 = arith.maximumf %8, %11 : vector<1x22x22xf32>
    %13 = arith.addf %9, %11 : vector<1x22x22xf32>
    %cst = arith.constant 0.000000e+00 : f32
    %14 = vector.broadcast %cst : f32 to vector<1x16x22xf32>
    %cst_12 = arith.constant 0.000000e+00 : f32
    %15 = vector.broadcast %cst_12 : f32 to vector<1x16x22xf32>
    %cst_13 = arith.constant 0.000000e+00 : f32
    %16 = vector.broadcast %cst_13 : f32 to vector<1x16x22xf32>
    %cst_14 = arith.constant 0.000000e+00 : f32
    %17 = vector.broadcast %cst_14 : f32 to vector<1x16x22xf32>
    %cst_15 = arith.constant 0.000000e+00 : f32
    %18 = vector.broadcast %cst_15 : f32 to vector<1x16x22xf32>
    %cst_16 = arith.constant 0.000000e+00 : f32
    %19 = vector.broadcast %cst_16 : f32 to vector<1x16x22xf32>
    %cst_17 = arith.constant 0.000000e+00 : f32
    %20 = vector.broadcast %cst_17 : f32 to vector<1x16x22xf32>
    %21 = vector.extract_strided_slice %12 {offsets = [0, 0, 0], sizes = [1, 16, 22], strides = [1, 1, 1]} : vector<1x22x22xf32> to vector<1x16x22xf32>
    %c0_18 = arith.constant 0 : index
    %22 = memref.load %arg1[%c0_18] : memref<98xf32, #tpu.memory_space<smem>>
    %23 = vector.broadcast %22 : f32 to vector<1x16x22xf32>
    %24 = arith.mulf %23, %21 : vector<1x16x22xf32>
    %25 = arith.addf %14, %24 : vector<1x16x22xf32>
    %c1_19 = arith.constant 1 : index
    %26 = memref.load %arg1[%c1_19] : memref<98xf32, #tpu.memory_space<smem>>
    %27 = vector.broadcast %26 : f32 to vector<1x16x22xf32>
    %28 = arith.mulf %27, %21 : vector<1x16x22xf32>
    %29 = arith.addf %15, %28 : vector<1x16x22xf32>
    %c2_20 = arith.constant 2 : index
    %30 = memref.load %arg1[%c2_20] : memref<98xf32, #tpu.memory_space<smem>>
    %31 = vector.broadcast %30 : f32 to vector<1x16x22xf32>
    %32 = arith.mulf %31, %21 : vector<1x16x22xf32>
    %33 = arith.addf %16, %32 : vector<1x16x22xf32>
    %c3_21 = arith.constant 3 : index
    %34 = memref.load %arg1[%c3_21] : memref<98xf32, #tpu.memory_space<smem>>
    %35 = vector.broadcast %34 : f32 to vector<1x16x22xf32>
    %36 = arith.mulf %35, %21 : vector<1x16x22xf32>
    %37 = arith.addf %17, %36 : vector<1x16x22xf32>
    %c4 = arith.constant 4 : index
    %38 = memref.load %arg1[%c4] : memref<98xf32, #tpu.memory_space<smem>>
    %39 = vector.broadcast %38 : f32 to vector<1x16x22xf32>
    %40 = arith.mulf %39, %21 : vector<1x16x22xf32>
    %41 = arith.addf %18, %40 : vector<1x16x22xf32>
    %c5 = arith.constant 5 : index
    %42 = memref.load %arg1[%c5] : memref<98xf32, #tpu.memory_space<smem>>
    %43 = vector.broadcast %42 : f32 to vector<1x16x22xf32>
    %44 = arith.mulf %43, %21 : vector<1x16x22xf32>
    %45 = arith.addf %19, %44 : vector<1x16x22xf32>
    %c6 = arith.constant 6 : index
    %46 = memref.load %arg1[%c6] : memref<98xf32, #tpu.memory_space<smem>>
    %47 = vector.broadcast %46 : f32 to vector<1x16x22xf32>
    %48 = arith.mulf %47, %21 : vector<1x16x22xf32>
    %49 = arith.addf %20, %48 : vector<1x16x22xf32>
    %50 = vector.extract_strided_slice %12 {offsets = [0, 1, 0], sizes = [1, 16, 22], strides = [1, 1, 1]} : vector<1x22x22xf32> to vector<1x16x22xf32>
    %c7 = arith.constant 7 : index
    %51 = memref.load %arg1[%c7] : memref<98xf32, #tpu.memory_space<smem>>
    %52 = vector.broadcast %51 : f32 to vector<1x16x22xf32>
    %53 = arith.mulf %52, %50 : vector<1x16x22xf32>
    %54 = arith.addf %25, %53 : vector<1x16x22xf32>
    %c8 = arith.constant 8 : index
    %55 = memref.load %arg1[%c8] : memref<98xf32, #tpu.memory_space<smem>>
    %56 = vector.broadcast %55 : f32 to vector<1x16x22xf32>
    %57 = arith.mulf %56, %50 : vector<1x16x22xf32>
    %58 = arith.addf %29, %57 : vector<1x16x22xf32>
    %c9 = arith.constant 9 : index
    %59 = memref.load %arg1[%c9] : memref<98xf32, #tpu.memory_space<smem>>
    %60 = vector.broadcast %59 : f32 to vector<1x16x22xf32>
    %61 = arith.mulf %60, %50 : vector<1x16x22xf32>
    %62 = arith.addf %33, %61 : vector<1x16x22xf32>
    %c10 = arith.constant 10 : index
    %63 = memref.load %arg1[%c10] : memref<98xf32, #tpu.memory_space<smem>>
    %64 = vector.broadcast %63 : f32 to vector<1x16x22xf32>
    %65 = arith.mulf %64, %50 : vector<1x16x22xf32>
    %66 = arith.addf %37, %65 : vector<1x16x22xf32>
    %c11 = arith.constant 11 : index
    %67 = memref.load %arg1[%c11] : memref<98xf32, #tpu.memory_space<smem>>
    %68 = vector.broadcast %67 : f32 to vector<1x16x22xf32>
    %69 = arith.mulf %68, %50 : vector<1x16x22xf32>
    %70 = arith.addf %41, %69 : vector<1x16x22xf32>
    %c12 = arith.constant 12 : index
    %71 = memref.load %arg1[%c12] : memref<98xf32, #tpu.memory_space<smem>>
    %72 = vector.broadcast %71 : f32 to vector<1x16x22xf32>
    %73 = arith.mulf %72, %50 : vector<1x16x22xf32>
    %74 = arith.addf %45, %73 : vector<1x16x22xf32>
    %c13 = arith.constant 13 : index
    %75 = memref.load %arg1[%c13] : memref<98xf32, #tpu.memory_space<smem>>
    %76 = vector.broadcast %75 : f32 to vector<1x16x22xf32>
    %77 = arith.mulf %76, %50 : vector<1x16x22xf32>
    %78 = arith.addf %49, %77 : vector<1x16x22xf32>
    %79 = vector.extract_strided_slice %12 {offsets = [0, 2, 0], sizes = [1, 16, 22], strides = [1, 1, 1]} : vector<1x22x22xf32> to vector<1x16x22xf32>
    %c14 = arith.constant 14 : index
    %80 = memref.load %arg1[%c14] : memref<98xf32, #tpu.memory_space<smem>>
    %81 = vector.broadcast %80 : f32 to vector<1x16x22xf32>
    %82 = arith.mulf %81, %79 : vector<1x16x22xf32>
    %83 = arith.addf %54, %82 : vector<1x16x22xf32>
    %c15 = arith.constant 15 : index
    %84 = memref.load %arg1[%c15] : memref<98xf32, #tpu.memory_space<smem>>
    %85 = vector.broadcast %84 : f32 to vector<1x16x22xf32>
    %86 = arith.mulf %85, %79 : vector<1x16x22xf32>
    %87 = arith.addf %58, %86 : vector<1x16x22xf32>
    %c16 = arith.constant 16 : index
    %88 = memref.load %arg1[%c16] : memref<98xf32, #tpu.memory_space<smem>>
    %89 = vector.broadcast %88 : f32 to vector<1x16x22xf32>
    %90 = arith.mulf %89, %79 : vector<1x16x22xf32>
    %91 = arith.addf %62, %90 : vector<1x16x22xf32>
    %c17 = arith.constant 17 : index
    %92 = memref.load %arg1[%c17] : memref<98xf32, #tpu.memory_space<smem>>
    %93 = vector.broadcast %92 : f32 to vector<1x16x22xf32>
    %94 = arith.mulf %93, %79 : vector<1x16x22xf32>
    %95 = arith.addf %66, %94 : vector<1x16x22xf32>
    %c18 = arith.constant 18 : index
    %96 = memref.load %arg1[%c18] : memref<98xf32, #tpu.memory_space<smem>>
    %97 = vector.broadcast %96 : f32 to vector<1x16x22xf32>
    %98 = arith.mulf %97, %79 : vector<1x16x22xf32>
    %99 = arith.addf %70, %98 : vector<1x16x22xf32>
    %c19 = arith.constant 19 : index
    %100 = memref.load %arg1[%c19] : memref<98xf32, #tpu.memory_space<smem>>
    %101 = vector.broadcast %100 : f32 to vector<1x16x22xf32>
    %102 = arith.mulf %101, %79 : vector<1x16x22xf32>
    %103 = arith.addf %74, %102 : vector<1x16x22xf32>
    %c20 = arith.constant 20 : index
    %104 = memref.load %arg1[%c20] : memref<98xf32, #tpu.memory_space<smem>>
    %105 = vector.broadcast %104 : f32 to vector<1x16x22xf32>
    %106 = arith.mulf %105, %79 : vector<1x16x22xf32>
    %107 = arith.addf %78, %106 : vector<1x16x22xf32>
    %108 = vector.extract_strided_slice %12 {offsets = [0, 3, 0], sizes = [1, 16, 22], strides = [1, 1, 1]} : vector<1x22x22xf32> to vector<1x16x22xf32>
    %c21 = arith.constant 21 : index
    %109 = memref.load %arg1[%c21] : memref<98xf32, #tpu.memory_space<smem>>
    %110 = vector.broadcast %109 : f32 to vector<1x16x22xf32>
    %111 = arith.mulf %110, %108 : vector<1x16x22xf32>
    %112 = arith.addf %83, %111 : vector<1x16x22xf32>
    %c22 = arith.constant 22 : index
    %113 = memref.load %arg1[%c22] : memref<98xf32, #tpu.memory_space<smem>>
    %114 = vector.broadcast %113 : f32 to vector<1x16x22xf32>
    %115 = arith.mulf %114, %108 : vector<1x16x22xf32>
    %116 = arith.addf %87, %115 : vector<1x16x22xf32>
    %c23 = arith.constant 23 : index
    %117 = memref.load %arg1[%c23] : memref<98xf32, #tpu.memory_space<smem>>
    %118 = vector.broadcast %117 : f32 to vector<1x16x22xf32>
    %119 = arith.mulf %118, %108 : vector<1x16x22xf32>
    %120 = arith.addf %91, %119 : vector<1x16x22xf32>
    %c24 = arith.constant 24 : index
    %121 = memref.load %arg1[%c24] : memref<98xf32, #tpu.memory_space<smem>>
    %122 = vector.broadcast %121 : f32 to vector<1x16x22xf32>
    %123 = arith.mulf %122, %108 : vector<1x16x22xf32>
    %124 = arith.addf %95, %123 : vector<1x16x22xf32>
    %c25 = arith.constant 25 : index
    %125 = memref.load %arg1[%c25] : memref<98xf32, #tpu.memory_space<smem>>
    %126 = vector.broadcast %125 : f32 to vector<1x16x22xf32>
    %127 = arith.mulf %126, %108 : vector<1x16x22xf32>
    %128 = arith.addf %99, %127 : vector<1x16x22xf32>
    %c26 = arith.constant 26 : index
    %129 = memref.load %arg1[%c26] : memref<98xf32, #tpu.memory_space<smem>>
    %130 = vector.broadcast %129 : f32 to vector<1x16x22xf32>
    %131 = arith.mulf %130, %108 : vector<1x16x22xf32>
    %132 = arith.addf %103, %131 : vector<1x16x22xf32>
    %c27 = arith.constant 27 : index
    %133 = memref.load %arg1[%c27] : memref<98xf32, #tpu.memory_space<smem>>
    %134 = vector.broadcast %133 : f32 to vector<1x16x22xf32>
    %135 = arith.mulf %134, %108 : vector<1x16x22xf32>
    %136 = arith.addf %107, %135 : vector<1x16x22xf32>
    %137 = vector.extract_strided_slice %12 {offsets = [0, 4, 0], sizes = [1, 16, 22], strides = [1, 1, 1]} : vector<1x22x22xf32> to vector<1x16x22xf32>
    %c28 = arith.constant 28 : index
    %138 = memref.load %arg1[%c28] : memref<98xf32, #tpu.memory_space<smem>>
    %139 = vector.broadcast %138 : f32 to vector<1x16x22xf32>
    %140 = arith.mulf %139, %137 : vector<1x16x22xf32>
    %141 = arith.addf %112, %140 : vector<1x16x22xf32>
    %c29 = arith.constant 29 : index
    %142 = memref.load %arg1[%c29] : memref<98xf32, #tpu.memory_space<smem>>
    %143 = vector.broadcast %142 : f32 to vector<1x16x22xf32>
    %144 = arith.mulf %143, %137 : vector<1x16x22xf32>
    %145 = arith.addf %116, %144 : vector<1x16x22xf32>
    %c30 = arith.constant 30 : index
    %146 = memref.load %arg1[%c30] : memref<98xf32, #tpu.memory_space<smem>>
    %147 = vector.broadcast %146 : f32 to vector<1x16x22xf32>
    %148 = arith.mulf %147, %137 : vector<1x16x22xf32>
    %149 = arith.addf %120, %148 : vector<1x16x22xf32>
    %c31 = arith.constant 31 : index
    %150 = memref.load %arg1[%c31] : memref<98xf32, #tpu.memory_space<smem>>
    %151 = vector.broadcast %150 : f32 to vector<1x16x22xf32>
    %152 = arith.mulf %151, %137 : vector<1x16x22xf32>
    %153 = arith.addf %124, %152 : vector<1x16x22xf32>
    %c32 = arith.constant 32 : index
    %154 = memref.load %arg1[%c32] : memref<98xf32, #tpu.memory_space<smem>>
    %155 = vector.broadcast %154 : f32 to vector<1x16x22xf32>
    %156 = arith.mulf %155, %137 : vector<1x16x22xf32>
    %157 = arith.addf %128, %156 : vector<1x16x22xf32>
    %c33 = arith.constant 33 : index
    %158 = memref.load %arg1[%c33] : memref<98xf32, #tpu.memory_space<smem>>
    %159 = vector.broadcast %158 : f32 to vector<1x16x22xf32>
    %160 = arith.mulf %159, %137 : vector<1x16x22xf32>
    %161 = arith.addf %132, %160 : vector<1x16x22xf32>
    %c34 = arith.constant 34 : index
    %162 = memref.load %arg1[%c34] : memref<98xf32, #tpu.memory_space<smem>>
    %163 = vector.broadcast %162 : f32 to vector<1x16x22xf32>
    %164 = arith.mulf %163, %137 : vector<1x16x22xf32>
    %165 = arith.addf %136, %164 : vector<1x16x22xf32>
    %166 = vector.extract_strided_slice %12 {offsets = [0, 5, 0], sizes = [1, 16, 22], strides = [1, 1, 1]} : vector<1x22x22xf32> to vector<1x16x22xf32>
    %c35 = arith.constant 35 : index
    %167 = memref.load %arg1[%c35] : memref<98xf32, #tpu.memory_space<smem>>
    %168 = vector.broadcast %167 : f32 to vector<1x16x22xf32>
    %169 = arith.mulf %168, %166 : vector<1x16x22xf32>
    %170 = arith.addf %141, %169 : vector<1x16x22xf32>
    %c36 = arith.constant 36 : index
    %171 = memref.load %arg1[%c36] : memref<98xf32, #tpu.memory_space<smem>>
    %172 = vector.broadcast %171 : f32 to vector<1x16x22xf32>
    %173 = arith.mulf %172, %166 : vector<1x16x22xf32>
    %174 = arith.addf %145, %173 : vector<1x16x22xf32>
    %c37 = arith.constant 37 : index
    %175 = memref.load %arg1[%c37] : memref<98xf32, #tpu.memory_space<smem>>
    %176 = vector.broadcast %175 : f32 to vector<1x16x22xf32>
    %177 = arith.mulf %176, %166 : vector<1x16x22xf32>
    %178 = arith.addf %149, %177 : vector<1x16x22xf32>
    %c38 = arith.constant 38 : index
    %179 = memref.load %arg1[%c38] : memref<98xf32, #tpu.memory_space<smem>>
    %180 = vector.broadcast %179 : f32 to vector<1x16x22xf32>
    %181 = arith.mulf %180, %166 : vector<1x16x22xf32>
    %182 = arith.addf %153, %181 : vector<1x16x22xf32>
    %c39 = arith.constant 39 : index
    %183 = memref.load %arg1[%c39] : memref<98xf32, #tpu.memory_space<smem>>
    %184 = vector.broadcast %183 : f32 to vector<1x16x22xf32>
    %185 = arith.mulf %184, %166 : vector<1x16x22xf32>
    %186 = arith.addf %157, %185 : vector<1x16x22xf32>
    %c40 = arith.constant 40 : index
    %187 = memref.load %arg1[%c40] : memref<98xf32, #tpu.memory_space<smem>>
    %188 = vector.broadcast %187 : f32 to vector<1x16x22xf32>
    %189 = arith.mulf %188, %166 : vector<1x16x22xf32>
    %190 = arith.addf %161, %189 : vector<1x16x22xf32>
    %c41 = arith.constant 41 : index
    %191 = memref.load %arg1[%c41] : memref<98xf32, #tpu.memory_space<smem>>
    %192 = vector.broadcast %191 : f32 to vector<1x16x22xf32>
    %193 = arith.mulf %192, %166 : vector<1x16x22xf32>
    %194 = arith.addf %165, %193 : vector<1x16x22xf32>
    %195 = vector.extract_strided_slice %12 {offsets = [0, 6, 0], sizes = [1, 16, 22], strides = [1, 1, 1]} : vector<1x22x22xf32> to vector<1x16x22xf32>
    %c42 = arith.constant 42 : index
    %196 = memref.load %arg1[%c42] : memref<98xf32, #tpu.memory_space<smem>>
    %197 = vector.broadcast %196 : f32 to vector<1x16x22xf32>
    %198 = arith.mulf %197, %195 : vector<1x16x22xf32>
    %199 = arith.addf %170, %198 : vector<1x16x22xf32>
    %c43 = arith.constant 43 : index
    %200 = memref.load %arg1[%c43] : memref<98xf32, #tpu.memory_space<smem>>
    %201 = vector.broadcast %200 : f32 to vector<1x16x22xf32>
    %202 = arith.mulf %201, %195 : vector<1x16x22xf32>
    %203 = arith.addf %174, %202 : vector<1x16x22xf32>
    %c44 = arith.constant 44 : index
    %204 = memref.load %arg1[%c44] : memref<98xf32, #tpu.memory_space<smem>>
    %205 = vector.broadcast %204 : f32 to vector<1x16x22xf32>
    %206 = arith.mulf %205, %195 : vector<1x16x22xf32>
    %207 = arith.addf %178, %206 : vector<1x16x22xf32>
    %c45 = arith.constant 45 : index
    %208 = memref.load %arg1[%c45] : memref<98xf32, #tpu.memory_space<smem>>
    %209 = vector.broadcast %208 : f32 to vector<1x16x22xf32>
    %210 = arith.mulf %209, %195 : vector<1x16x22xf32>
    %211 = arith.addf %182, %210 : vector<1x16x22xf32>
    %c46 = arith.constant 46 : index
    %212 = memref.load %arg1[%c46] : memref<98xf32, #tpu.memory_space<smem>>
    %213 = vector.broadcast %212 : f32 to vector<1x16x22xf32>
    %214 = arith.mulf %213, %195 : vector<1x16x22xf32>
    %215 = arith.addf %186, %214 : vector<1x16x22xf32>
    %c47 = arith.constant 47 : index
    %216 = memref.load %arg1[%c47] : memref<98xf32, #tpu.memory_space<smem>>
    %217 = vector.broadcast %216 : f32 to vector<1x16x22xf32>
    %218 = arith.mulf %217, %195 : vector<1x16x22xf32>
    %219 = arith.addf %190, %218 : vector<1x16x22xf32>
    %c48 = arith.constant 48 : index
    %220 = memref.load %arg1[%c48] : memref<98xf32, #tpu.memory_space<smem>>
    %221 = vector.broadcast %220 : f32 to vector<1x16x22xf32>
    %222 = arith.mulf %221, %195 : vector<1x16x22xf32>
    %223 = arith.addf %194, %222 : vector<1x16x22xf32>
    %224 = vector.extract_strided_slice %13 {offsets = [0, 0, 0], sizes = [1, 16, 22], strides = [1, 1, 1]} : vector<1x22x22xf32> to vector<1x16x22xf32>
    %c49 = arith.constant 49 : index
    %225 = memref.load %arg1[%c49] : memref<98xf32, #tpu.memory_space<smem>>
    %226 = vector.broadcast %225 : f32 to vector<1x16x22xf32>
    %227 = arith.mulf %226, %224 : vector<1x16x22xf32>
    %228 = arith.addf %199, %227 : vector<1x16x22xf32>
    %c50 = arith.constant 50 : index
    %229 = memref.load %arg1[%c50] : memref<98xf32, #tpu.memory_space<smem>>
    %230 = vector.broadcast %229 : f32 to vector<1x16x22xf32>
    %231 = arith.mulf %230, %224 : vector<1x16x22xf32>
    %232 = arith.addf %203, %231 : vector<1x16x22xf32>
    %c51 = arith.constant 51 : index
    %233 = memref.load %arg1[%c51] : memref<98xf32, #tpu.memory_space<smem>>
    %234 = vector.broadcast %233 : f32 to vector<1x16x22xf32>
    %235 = arith.mulf %234, %224 : vector<1x16x22xf32>
    %236 = arith.addf %207, %235 : vector<1x16x22xf32>
    %c52 = arith.constant 52 : index
    %237 = memref.load %arg1[%c52] : memref<98xf32, #tpu.memory_space<smem>>
    %238 = vector.broadcast %237 : f32 to vector<1x16x22xf32>
    %239 = arith.mulf %238, %224 : vector<1x16x22xf32>
    %240 = arith.addf %211, %239 : vector<1x16x22xf32>
    %c53 = arith.constant 53 : index
    %241 = memref.load %arg1[%c53] : memref<98xf32, #tpu.memory_space<smem>>
    %242 = vector.broadcast %241 : f32 to vector<1x16x22xf32>
    %243 = arith.mulf %242, %224 : vector<1x16x22xf32>
    %244 = arith.addf %215, %243 : vector<1x16x22xf32>
    %c54 = arith.constant 54 : index
    %245 = memref.load %arg1[%c54] : memref<98xf32, #tpu.memory_space<smem>>
    %246 = vector.broadcast %245 : f32 to vector<1x16x22xf32>
    %247 = arith.mulf %246, %224 : vector<1x16x22xf32>
    %248 = arith.addf %219, %247 : vector<1x16x22xf32>
    %c55 = arith.constant 55 : index
    %249 = memref.load %arg1[%c55] : memref<98xf32, #tpu.memory_space<smem>>
    %250 = vector.broadcast %249 : f32 to vector<1x16x22xf32>
    %251 = arith.mulf %250, %224 : vector<1x16x22xf32>
    %252 = arith.addf %223, %251 : vector<1x16x22xf32>
    %253 = vector.extract_strided_slice %13 {offsets = [0, 1, 0], sizes = [1, 16, 22], strides = [1, 1, 1]} : vector<1x22x22xf32> to vector<1x16x22xf32>
    %c56 = arith.constant 56 : index
    %254 = memref.load %arg1[%c56] : memref<98xf32, #tpu.memory_space<smem>>
    %255 = vector.broadcast %254 : f32 to vector<1x16x22xf32>
    %256 = arith.mulf %255, %253 : vector<1x16x22xf32>
    %257 = arith.addf %228, %256 : vector<1x16x22xf32>
    %c57 = arith.constant 57 : index
    %258 = memref.load %arg1[%c57] : memref<98xf32, #tpu.memory_space<smem>>
    %259 = vector.broadcast %258 : f32 to vector<1x16x22xf32>
    %260 = arith.mulf %259, %253 : vector<1x16x22xf32>
    %261 = arith.addf %232, %260 : vector<1x16x22xf32>
    %c58 = arith.constant 58 : index
    %262 = memref.load %arg1[%c58] : memref<98xf32, #tpu.memory_space<smem>>
    %263 = vector.broadcast %262 : f32 to vector<1x16x22xf32>
    %264 = arith.mulf %263, %253 : vector<1x16x22xf32>
    %265 = arith.addf %236, %264 : vector<1x16x22xf32>
    %c59 = arith.constant 59 : index
    %266 = memref.load %arg1[%c59] : memref<98xf32, #tpu.memory_space<smem>>
    %267 = vector.broadcast %266 : f32 to vector<1x16x22xf32>
    %268 = arith.mulf %267, %253 : vector<1x16x22xf32>
    %269 = arith.addf %240, %268 : vector<1x16x22xf32>
    %c60 = arith.constant 60 : index
    %270 = memref.load %arg1[%c60] : memref<98xf32, #tpu.memory_space<smem>>
    %271 = vector.broadcast %270 : f32 to vector<1x16x22xf32>
    %272 = arith.mulf %271, %253 : vector<1x16x22xf32>
    %273 = arith.addf %244, %272 : vector<1x16x22xf32>
    %c61 = arith.constant 61 : index
    %274 = memref.load %arg1[%c61] : memref<98xf32, #tpu.memory_space<smem>>
    %275 = vector.broadcast %274 : f32 to vector<1x16x22xf32>
    %276 = arith.mulf %275, %253 : vector<1x16x22xf32>
    %277 = arith.addf %248, %276 : vector<1x16x22xf32>
    %c62 = arith.constant 62 : index
    %278 = memref.load %arg1[%c62] : memref<98xf32, #tpu.memory_space<smem>>
    %279 = vector.broadcast %278 : f32 to vector<1x16x22xf32>
    %280 = arith.mulf %279, %253 : vector<1x16x22xf32>
    %281 = arith.addf %252, %280 : vector<1x16x22xf32>
    %282 = vector.extract_strided_slice %13 {offsets = [0, 2, 0], sizes = [1, 16, 22], strides = [1, 1, 1]} : vector<1x22x22xf32> to vector<1x16x22xf32>
    %c63 = arith.constant 63 : index
    %283 = memref.load %arg1[%c63] : memref<98xf32, #tpu.memory_space<smem>>
    %284 = vector.broadcast %283 : f32 to vector<1x16x22xf32>
    %285 = arith.mulf %284, %282 : vector<1x16x22xf32>
    %286 = arith.addf %257, %285 : vector<1x16x22xf32>
    %c64 = arith.constant 64 : index
    %287 = memref.load %arg1[%c64] : memref<98xf32, #tpu.memory_space<smem>>
    %288 = vector.broadcast %287 : f32 to vector<1x16x22xf32>
    %289 = arith.mulf %288, %282 : vector<1x16x22xf32>
    %290 = arith.addf %261, %289 : vector<1x16x22xf32>
    %c65 = arith.constant 65 : index
    %291 = memref.load %arg1[%c65] : memref<98xf32, #tpu.memory_space<smem>>
    %292 = vector.broadcast %291 : f32 to vector<1x16x22xf32>
    %293 = arith.mulf %292, %282 : vector<1x16x22xf32>
    %294 = arith.addf %265, %293 : vector<1x16x22xf32>
    %c66 = arith.constant 66 : index
    %295 = memref.load %arg1[%c66] : memref<98xf32, #tpu.memory_space<smem>>
    %296 = vector.broadcast %295 : f32 to vector<1x16x22xf32>
    %297 = arith.mulf %296, %282 : vector<1x16x22xf32>
    %298 = arith.addf %269, %297 : vector<1x16x22xf32>
    %c67 = arith.constant 67 : index
    %299 = memref.load %arg1[%c67] : memref<98xf32, #tpu.memory_space<smem>>
    %300 = vector.broadcast %299 : f32 to vector<1x16x22xf32>
    %301 = arith.mulf %300, %282 : vector<1x16x22xf32>
    %302 = arith.addf %273, %301 : vector<1x16x22xf32>
    %c68 = arith.constant 68 : index
    %303 = memref.load %arg1[%c68] : memref<98xf32, #tpu.memory_space<smem>>
    %304 = vector.broadcast %303 : f32 to vector<1x16x22xf32>
    %305 = arith.mulf %304, %282 : vector<1x16x22xf32>
    %306 = arith.addf %277, %305 : vector<1x16x22xf32>
    %c69 = arith.constant 69 : index
    %307 = memref.load %arg1[%c69] : memref<98xf32, #tpu.memory_space<smem>>
    %308 = vector.broadcast %307 : f32 to vector<1x16x22xf32>
    %309 = arith.mulf %308, %282 : vector<1x16x22xf32>
    %310 = arith.addf %281, %309 : vector<1x16x22xf32>
    %311 = vector.extract_strided_slice %13 {offsets = [0, 3, 0], sizes = [1, 16, 22], strides = [1, 1, 1]} : vector<1x22x22xf32> to vector<1x16x22xf32>
    %c70 = arith.constant 70 : index
    %312 = memref.load %arg1[%c70] : memref<98xf32, #tpu.memory_space<smem>>
    %313 = vector.broadcast %312 : f32 to vector<1x16x22xf32>
    %314 = arith.mulf %313, %311 : vector<1x16x22xf32>
    %315 = arith.addf %286, %314 : vector<1x16x22xf32>
    %c71 = arith.constant 71 : index
    %316 = memref.load %arg1[%c71] : memref<98xf32, #tpu.memory_space<smem>>
    %317 = vector.broadcast %316 : f32 to vector<1x16x22xf32>
    %318 = arith.mulf %317, %311 : vector<1x16x22xf32>
    %319 = arith.addf %290, %318 : vector<1x16x22xf32>
    %c72 = arith.constant 72 : index
    %320 = memref.load %arg1[%c72] : memref<98xf32, #tpu.memory_space<smem>>
    %321 = vector.broadcast %320 : f32 to vector<1x16x22xf32>
    %322 = arith.mulf %321, %311 : vector<1x16x22xf32>
    %323 = arith.addf %294, %322 : vector<1x16x22xf32>
    %c73 = arith.constant 73 : index
    %324 = memref.load %arg1[%c73] : memref<98xf32, #tpu.memory_space<smem>>
    %325 = vector.broadcast %324 : f32 to vector<1x16x22xf32>
    %326 = arith.mulf %325, %311 : vector<1x16x22xf32>
    %327 = arith.addf %298, %326 : vector<1x16x22xf32>
    %c74 = arith.constant 74 : index
    %328 = memref.load %arg1[%c74] : memref<98xf32, #tpu.memory_space<smem>>
    %329 = vector.broadcast %328 : f32 to vector<1x16x22xf32>
    %330 = arith.mulf %329, %311 : vector<1x16x22xf32>
    %331 = arith.addf %302, %330 : vector<1x16x22xf32>
    %c75 = arith.constant 75 : index
    %332 = memref.load %arg1[%c75] : memref<98xf32, #tpu.memory_space<smem>>
    %333 = vector.broadcast %332 : f32 to vector<1x16x22xf32>
    %334 = arith.mulf %333, %311 : vector<1x16x22xf32>
    %335 = arith.addf %306, %334 : vector<1x16x22xf32>
    %c76 = arith.constant 76 : index
    %336 = memref.load %arg1[%c76] : memref<98xf32, #tpu.memory_space<smem>>
    %337 = vector.broadcast %336 : f32 to vector<1x16x22xf32>
    %338 = arith.mulf %337, %311 : vector<1x16x22xf32>
    %339 = arith.addf %310, %338 : vector<1x16x22xf32>
    %340 = vector.extract_strided_slice %13 {offsets = [0, 4, 0], sizes = [1, 16, 22], strides = [1, 1, 1]} : vector<1x22x22xf32> to vector<1x16x22xf32>
    %c77 = arith.constant 77 : index
    %341 = memref.load %arg1[%c77] : memref<98xf32, #tpu.memory_space<smem>>
    %342 = vector.broadcast %341 : f32 to vector<1x16x22xf32>
    %343 = arith.mulf %342, %340 : vector<1x16x22xf32>
    %344 = arith.addf %315, %343 : vector<1x16x22xf32>
    %c78 = arith.constant 78 : index
    %345 = memref.load %arg1[%c78] : memref<98xf32, #tpu.memory_space<smem>>
    %346 = vector.broadcast %345 : f32 to vector<1x16x22xf32>
    %347 = arith.mulf %346, %340 : vector<1x16x22xf32>
    %348 = arith.addf %319, %347 : vector<1x16x22xf32>
    %c79 = arith.constant 79 : index
    %349 = memref.load %arg1[%c79] : memref<98xf32, #tpu.memory_space<smem>>
    %350 = vector.broadcast %349 : f32 to vector<1x16x22xf32>
    %351 = arith.mulf %350, %340 : vector<1x16x22xf32>
    %352 = arith.addf %323, %351 : vector<1x16x22xf32>
    %c80 = arith.constant 80 : index
    %353 = memref.load %arg1[%c80] : memref<98xf32, #tpu.memory_space<smem>>
    %354 = vector.broadcast %353 : f32 to vector<1x16x22xf32>
    %355 = arith.mulf %354, %340 : vector<1x16x22xf32>
    %356 = arith.addf %327, %355 : vector<1x16x22xf32>
    %c81 = arith.constant 81 : index
    %357 = memref.load %arg1[%c81] : memref<98xf32, #tpu.memory_space<smem>>
    %358 = vector.broadcast %357 : f32 to vector<1x16x22xf32>
    %359 = arith.mulf %358, %340 : vector<1x16x22xf32>
    %360 = arith.addf %331, %359 : vector<1x16x22xf32>
    %c82 = arith.constant 82 : index
    %361 = memref.load %arg1[%c82] : memref<98xf32, #tpu.memory_space<smem>>
    %362 = vector.broadcast %361 : f32 to vector<1x16x22xf32>
    %363 = arith.mulf %362, %340 : vector<1x16x22xf32>
    %364 = arith.addf %335, %363 : vector<1x16x22xf32>
    %c83 = arith.constant 83 : index
    %365 = memref.load %arg1[%c83] : memref<98xf32, #tpu.memory_space<smem>>
    %366 = vector.broadcast %365 : f32 to vector<1x16x22xf32>
    %367 = arith.mulf %366, %340 : vector<1x16x22xf32>
    %368 = arith.addf %339, %367 : vector<1x16x22xf32>
    %369 = vector.extract_strided_slice %13 {offsets = [0, 5, 0], sizes = [1, 16, 22], strides = [1, 1, 1]} : vector<1x22x22xf32> to vector<1x16x22xf32>
    %c84 = arith.constant 84 : index
    %370 = memref.load %arg1[%c84] : memref<98xf32, #tpu.memory_space<smem>>
    %371 = vector.broadcast %370 : f32 to vector<1x16x22xf32>
    %372 = arith.mulf %371, %369 : vector<1x16x22xf32>
    %373 = arith.addf %344, %372 : vector<1x16x22xf32>
    %c85 = arith.constant 85 : index
    %374 = memref.load %arg1[%c85] : memref<98xf32, #tpu.memory_space<smem>>
    %375 = vector.broadcast %374 : f32 to vector<1x16x22xf32>
    %376 = arith.mulf %375, %369 : vector<1x16x22xf32>
    %377 = arith.addf %348, %376 : vector<1x16x22xf32>
    %c86 = arith.constant 86 : index
    %378 = memref.load %arg1[%c86] : memref<98xf32, #tpu.memory_space<smem>>
    %379 = vector.broadcast %378 : f32 to vector<1x16x22xf32>
    %380 = arith.mulf %379, %369 : vector<1x16x22xf32>
    %381 = arith.addf %352, %380 : vector<1x16x22xf32>
    %c87 = arith.constant 87 : index
    %382 = memref.load %arg1[%c87] : memref<98xf32, #tpu.memory_space<smem>>
    %383 = vector.broadcast %382 : f32 to vector<1x16x22xf32>
    %384 = arith.mulf %383, %369 : vector<1x16x22xf32>
    %385 = arith.addf %356, %384 : vector<1x16x22xf32>
    %c88 = arith.constant 88 : index
    %386 = memref.load %arg1[%c88] : memref<98xf32, #tpu.memory_space<smem>>
    %387 = vector.broadcast %386 : f32 to vector<1x16x22xf32>
    %388 = arith.mulf %387, %369 : vector<1x16x22xf32>
    %389 = arith.addf %360, %388 : vector<1x16x22xf32>
    %c89 = arith.constant 89 : index
    %390 = memref.load %arg1[%c89] : memref<98xf32, #tpu.memory_space<smem>>
    %391 = vector.broadcast %390 : f32 to vector<1x16x22xf32>
    %392 = arith.mulf %391, %369 : vector<1x16x22xf32>
    %393 = arith.addf %364, %392 : vector<1x16x22xf32>
    %c90 = arith.constant 90 : index
    %394 = memref.load %arg1[%c90] : memref<98xf32, #tpu.memory_space<smem>>
    %395 = vector.broadcast %394 : f32 to vector<1x16x22xf32>
    %396 = arith.mulf %395, %369 : vector<1x16x22xf32>
    %397 = arith.addf %368, %396 : vector<1x16x22xf32>
    %398 = vector.extract_strided_slice %13 {offsets = [0, 6, 0], sizes = [1, 16, 22], strides = [1, 1, 1]} : vector<1x22x22xf32> to vector<1x16x22xf32>
    %c91 = arith.constant 91 : index
    %399 = memref.load %arg1[%c91] : memref<98xf32, #tpu.memory_space<smem>>
    %400 = vector.broadcast %399 : f32 to vector<1x16x22xf32>
    %401 = arith.mulf %400, %398 : vector<1x16x22xf32>
    %402 = arith.addf %373, %401 : vector<1x16x22xf32>
    %c92 = arith.constant 92 : index
    %403 = memref.load %arg1[%c92] : memref<98xf32, #tpu.memory_space<smem>>
    %404 = vector.broadcast %403 : f32 to vector<1x16x22xf32>
    %405 = arith.mulf %404, %398 : vector<1x16x22xf32>
    %406 = arith.addf %377, %405 : vector<1x16x22xf32>
    %c93 = arith.constant 93 : index
    %407 = memref.load %arg1[%c93] : memref<98xf32, #tpu.memory_space<smem>>
    %408 = vector.broadcast %407 : f32 to vector<1x16x22xf32>
    %409 = arith.mulf %408, %398 : vector<1x16x22xf32>
    %410 = arith.addf %381, %409 : vector<1x16x22xf32>
    %c94 = arith.constant 94 : index
    %411 = memref.load %arg1[%c94] : memref<98xf32, #tpu.memory_space<smem>>
    %412 = vector.broadcast %411 : f32 to vector<1x16x22xf32>
    %413 = arith.mulf %412, %398 : vector<1x16x22xf32>
    %414 = arith.addf %385, %413 : vector<1x16x22xf32>
    %c95 = arith.constant 95 : index
    %415 = memref.load %arg1[%c95] : memref<98xf32, #tpu.memory_space<smem>>
    %416 = vector.broadcast %415 : f32 to vector<1x16x22xf32>
    %417 = arith.mulf %416, %398 : vector<1x16x22xf32>
    %418 = arith.addf %389, %417 : vector<1x16x22xf32>
    %c96 = arith.constant 96 : index
    %419 = memref.load %arg1[%c96] : memref<98xf32, #tpu.memory_space<smem>>
    %420 = vector.broadcast %419 : f32 to vector<1x16x22xf32>
    %421 = arith.mulf %420, %398 : vector<1x16x22xf32>
    %422 = arith.addf %393, %421 : vector<1x16x22xf32>
    %c97 = arith.constant 97 : index
    %423 = memref.load %arg1[%c97] : memref<98xf32, #tpu.memory_space<smem>>
    %424 = vector.broadcast %423 : f32 to vector<1x16x22xf32>
    %425 = arith.mulf %424, %398 : vector<1x16x22xf32>
    %426 = arith.addf %397, %425 : vector<1x16x22xf32>
    %427 = vector.extract_strided_slice %402 {offsets = [0, 0, 0], sizes = [1, 16, 16], strides = [1, 1, 1]} : vector<1x16x22xf32> to vector<1x16x16xf32>
    %428 = vector.extract_strided_slice %406 {offsets = [0, 0, 1], sizes = [1, 16, 16], strides = [1, 1, 1]} : vector<1x16x22xf32> to vector<1x16x16xf32>
    %429 = arith.addf %427, %428 : vector<1x16x16xf32>
    %430 = vector.extract_strided_slice %410 {offsets = [0, 0, 2], sizes = [1, 16, 16], strides = [1, 1, 1]} : vector<1x16x22xf32> to vector<1x16x16xf32>
    %431 = arith.addf %429, %430 : vector<1x16x16xf32>
    %432 = vector.extract_strided_slice %414 {offsets = [0, 0, 3], sizes = [1, 16, 16], strides = [1, 1, 1]} : vector<1x16x22xf32> to vector<1x16x16xf32>
    %433 = arith.addf %431, %432 : vector<1x16x16xf32>
    %434 = vector.extract_strided_slice %418 {offsets = [0, 0, 4], sizes = [1, 16, 16], strides = [1, 1, 1]} : vector<1x16x22xf32> to vector<1x16x16xf32>
    %435 = arith.addf %433, %434 : vector<1x16x16xf32>
    %436 = vector.extract_strided_slice %422 {offsets = [0, 0, 5], sizes = [1, 16, 16], strides = [1, 1, 1]} : vector<1x16x22xf32> to vector<1x16x16xf32>
    %437 = arith.addf %435, %436 : vector<1x16x16xf32>
    %438 = vector.extract_strided_slice %426 {offsets = [0, 0, 6], sizes = [1, 16, 16], strides = [1, 1, 1]} : vector<1x16x22xf32> to vector<1x16x16xf32>
    %439 = arith.addf %437, %438 : vector<1x16x16xf32>
    %c0_22 = arith.constant 0 : index
    %c0_23 = arith.constant 0 : index
    %c0_24 = arith.constant 0 : index
    %440 = vector.load %arg3[%c0_22, %c0_23, %c0_24] : memref<1x16x16xf32, #tpu.memory_space<vmem>>, vector<1x16x16xf32>
    tpu.vector_store %arg3[%c0_22, %c0_23, %c0_24], %439 {strides = array<i32>} : memref<1x16x16xf32, #tpu.memory_space<vmem>>, vector<1x16x16xf32>,
    return
  }
  func.func @transform_0(%arg0: i32) -> i32 {
    %c0_i32 = arith.constant 0 : i32
    %c0_i32_0 = arith.constant 0 : i32
    return %c0_i32 : i32
  }
  func.func @transform_1(%arg0: i32) -> (i32, i32, i32, i32) {
    %c0_i32 = arith.constant 0 : i32
    %c0_i32_0 = arith.constant 0 : i32
    %c0_i32_1 = arith.constant 0 : i32
    %c0_i32_2 = arith.constant 0 : i32
    return %arg0, %c0_i32, %c0_i32_0, %c0_i32_1 : i32, i32, i32, i32
  }
  func.func @transform_2(%arg0: i32) -> (i32, i32, i32) {
    %c0_i32 = arith.constant 0 : i32
    %c0_i32_0 = arith.constant 0 : i32
    %c0_i32_1 = arith.constant 0 : i32
    return %arg0, %c0_i32, %c0_i32_0 : i32, i32, i32
  }
}

</mosaic_0001>

<llo_original>
// kernel: tpu_custom_call.1
$region0: #{tpu_custom_call.1}
  #allocation0 [shape = 'u32[]', space=smem, size = 0x4, offset = 0x4, fixed_abs, tag = 'smem constant byte address 0x4 - core index']
  #allocation1 [shape = 'u32[144,128]{1,0:T(1,128)}', space=vmem, size = 0x12000, scoped, tag = 'internal scratch']
  %s0 = inlined_call_operand.vmem [shape: f32[98], index: 0, kind: input, shape index: {}]
  %s1 = inlined_call_operand.vmem [shape: f32[2,4,22,22], index: 1, kind: input, shape index: {}]
  %s2 = inlined_call_operand.hbm [shape: f32[2,16,16], index: 2, kind: output, shape index: {}]
  %s3 = sld [smem:[#allocation0]]
  $region45: #{tpu_custom_call.1} parent=0
    _
  %s5 = ssub.s32 1, %s3
  %s6 = scalar_select 0, %s5, %s3
  $region1: #{tpu_custom_call.1} parent=0
    #allocation2 [shape = 'u8[512]{0}', space=smem, size = 0x200, scoped, tag = 'input window, operand 0, single buffered']
    #allocation3 [shape = 's32[2]{0}', space=sflag, size = 0x8, scoped, tag = 'scoped memory for tpu_custom_call.1']
    #allocation4 [shape = 's32[2]{0}', space=sflag, size = 0x8, scoped, tag = 'scoped memory for tpu_custom_call.1']
    #allocation5 [shape = 'u8[16384]{0}', space=vmem, size = 0x4000, scoped, tag = 'output window, operand 0']
    %7 = vsyncpa [#allocation4], 0
    %8 = vsyncpa [#allocation3], 0
    %s9 = scalar_lea.sflag [#allocation3], 1
    %10 = vsyncpa %s9, 0
    loop: start=0, step=1, limit=4
    $region2: #{tpu_custom_call.1} parent=1 // loop_pre_header
      _
    $region3: #{tpu_custom_call.1} parent=1 // loop_header
      %s12 = sphi 0, %s16
      %p13 = scmp.ge.s32.totalorder %s12, 4
      %s20 = sphi 0, %s20
      %s22 = sphi 0, %s20
      %s23 = sphi 0, %s22
      %s37 = sphi 0, %s23
      %s43 = sphi 0, %s45
      %s46 = sphi 0, %s43
      %s47 = sphi 0, %s46
      %s63 = sphi 0, %s47
      %s69 = sphi 0, %s71
      %s72 = sphi 0, %s69
      %s73 = sphi 0, %s72
      %s89 = sphi 0, %s73
    $region4: #{tpu_custom_call.1} parent=1 // loop_header_branch
      %15 = sbr.rel (%p13) target = $region8
    $region5: #{tpu_custom_call.1} parent=1 // loop_body
      %s17 = ssub.s32 %s12, 1
      %s18 = ssub.s32 %s12, 2
      %s19 = sadd.s32 %s12, 1
      %s21 = sadd.s32 %s20, 1
      %p24 = scmp.eq.s32.totalorder %s12, 1
      %p25 = scmp.ne.s32.totalorder %s20, %s22
      %p26 = scmp.eq.s32.totalorder %s12, 0
      %p27 = por %p25, %p26
      %p28 = scmp.ne.s32.totalorder %s20, %s22
      %p29 = scmp.eq.s32.totalorder %s17, 1
      %p30 = por %p28, %p29
      %p31 = scmp.ne.s32.totalorder %s22, %s23
      %p32 = scmp.eq.s32.totalorder %s17, 0
      %p33 = por %p31, %p32
      %p34 = scmp.ne.s32.totalorder %s22, %s23
      %p35 = scmp.eq.s32.totalorder %s18, 1
      %p36 = por %p34, %p35
      %p38 = scmp.ne.s32.totalorder %s23, %s37
      %p39 = scmp.eq.s32.totalorder %s18, 0
      %p40 = por %p38, %p39
      %s41 = ssub.s32 %s12, %s19
      %p42 = scmp.eq.s32.totalorder %s41, 0
      %s44 = sadd.s32 %s43, 1
      %s45 = scalar_select %p42, %s43, %s44
      %p48 = pneg %p42
      %p49 = scmp.eq.s32.totalorder %s12, 1
      %p50 = por %p48, %p49
      %p51 = scmp.ne.s32.totalorder %s43, %s46
      %p52 = scmp.eq.s32.totalorder %s12, 0
      %p53 = por %p51, %p52
      %p54 = scmp.ne.s32.totalorder %s43, %s46
      %p55 = scmp.eq.s32.totalorder %s17, 1
      %p56 = por %p54, %p55
      %p57 = scmp.ne.s32.totalorder %s46, %s47
      %p58 = scmp.eq.s32.totalorder %s17, 0
      %p59 = por %p57, %p58
      %p60 = scmp.ne.s32.totalorder %s46, %s47
      %p61 = scmp.eq.s32.totalorder %s18, 1
      %p62 = por %p60, %p61
      %p64 = scmp.ne.s32.totalorder %s47, %s63
      %p65 = scmp.eq.s32.totalorder %s18, 0
      %p66 = por %p64, %p65
      %s67 = ssub.s32 %s12, %s19
      %p68 = scmp.eq.s32.totalorder %s67, 0
      %s70 = sadd.s32 %s69, 1
      %s71 = scalar_select %p68, %s69, %s70
      %p74 = pneg %p68
      %p75 = scmp.eq.s32.totalorder %s12, 1
      %p76 = por %p74, %p75
      %p77 = scmp.ne.s32.totalorder %s69, %s72
      %p78 = scmp.eq.s32.totalorder %s12, 0
      %p79 = por %p77, %p78
      %p80 = scmp.ne.s32.totalorder %s69, %s72
      %p81 = scmp.eq.s32.totalorder %s17, 1
      %p82 = por %p80, %p81
      %p83 = scmp.ne.s32.totalorder %s72, %s73
      %p84 = scmp.eq.s32.totalorder %s17, 0
      %p85 = por %p83, %p84
      %p86 = scmp.ne.s32.totalorder %s72, %s73
      %p87 = scmp.eq.s32.totalorder %s18, 1
      %p88 = por %p86, %p87
      %p90 = scmp.ne.s32.totalorder %s73, %s89
      %p91 = scmp.eq.s32.totalorder %s18, 0
      %p92 = por %p90, %p91
      %p93 = scmp.le.s32.totalorder 1, %s12
      %p94 = scmp.lt.s32.totalorder %s12, 3
      %p95 = pnand %p93, %p94
      %p96 = pneg %p95
      // Predicated region
      $region9: #{tpu_custom_call.1} parent=5 // pred_check
        _
      $region10: #{tpu_custom_call.1} parent=5 // pred_check_branch
        %98 = sbr.rel (%p95) target = $region12
      $region11: #{tpu_custom_call.1} parent=5 // pred_region
        %s99 = ssub.s32 %s12, 1
        // Predicated region
        $region13: #{tpu_custom_call.1} parent=11 // pred_check
          %p100 = pneg %p33
        $region14: #{tpu_custom_call.1} parent=11 // pred_check_branch
          %102 = sbr.rel (%p100) target = $region16
        $region15: #{tpu_custom_call.1} parent=11 // pred_region
          %s104 = ssub.s32 16, 16
          %105 = vsyncadd [#allocation4], %s104
          %s107 = sshll.u32 %s0, 4
          %s108 = int_to_ptr.vmem [resolvable:$true] %s107
          %110 = dma.vmem_to_smem %s108, 16, [#allocation2], [#allocation4]
        $region16: #{tpu_custom_call.1} parent=11 // pred_fallthru
          _
      $region12: #{tpu_custom_call.1} parent=5 // pred_fallthru
        _
      %p111 = scmp.lt.s32.totalorder %s12, 2
      // Predicated region
      $region17: #{tpu_custom_call.1} parent=5 // pred_check
        %p112 = pneg %p111
      $region18: #{tpu_custom_call.1} parent=5 // pred_check_branch
        %114 = sbr.rel (%p112) target = $region20
      $region19: #{tpu_custom_call.1} parent=5 // pred_region
        // Predicated region
        $region21: #{tpu_custom_call.1} parent=19 // pred_check
          %p115 = pneg %p53
        $region22: #{tpu_custom_call.1} parent=19 // pred_check_branch
          %117 = sbr.rel (%p115) target = $region24
        $region23: #{tpu_custom_call.1} parent=19 // pred_region
          %p118 = scmp.lt.s32.totalorder %s12, 1
          %s119 = scalar_select %p118, %s12, 1
          %s120 = smul.addr %s119, 12
          %s121 = smul.addr %s120, 8
          %s122 = scalar_lea.vmem %s1, %s121
        $region24: #{tpu_custom_call.1} parent=19 // pred_fallthru
          _
      $region20: #{tpu_custom_call.1} parent=5 // pred_fallthru
        _
      %p123 = scmp.le.s32.totalorder 1, %s12
      %p124 = scmp.lt.s32.totalorder %s12, 3
      %p125 = pnand %p123, %p124
      %p126 = pneg %p125
      // Predicated region
      $region25: #{tpu_custom_call.1} parent=5 // pred_check
        _
      $region26: #{tpu_custom_call.1} parent=5 // pred_check_branch
        %128 = sbr.rel (%p125) target = $region28
      $region27: #{tpu_custom_call.1} parent=5 // pred_region
        %s129 = ssub.s32 %s12, 1
        // Predicated region
        $region29: #{tpu_custom_call.1} parent=27 // pred_check
          %p130 = pneg %p33
        $region30: #{tpu_custom_call.1} parent=27 // pred_check_branch
          %132 = sbr.rel (%p130) target = $region32
        $region31: #{tpu_custom_call.1} parent=27 // pred_region
          %133 = dma.done [#allocation4], 16
        $region32: #{tpu_custom_call.1} parent=27 // pred_fallthru
          _
        %134 = sfence
        %p135 = pneg %p33
        %p136 = pneg %p30
        %p137 = scmp.lt.s32.totalorder %s17, 1
        %s138 = scalar_select %p137, %s17, 1
        %s139 = smul.addr %s138, 12
        %s140 = smul.addr %s139, 8
        %s141 = scalar_lea.vmem %s1, %s140
        %p142 = pneg %p59
        %p143 = pneg %p56
        %p144 = pneg %p85
        %p145 = pneg %p82
        %s146 = sand.u32 %s72, 1
        %s147 = scalar_lea.sflag [#allocation3], %s146
        %s148 = sand.u32 %s72, 1
        %s149 = smul.addr %s148, 16
        %s150 = scalar_lea.vmem [#allocation5], %s149
        %p151 = scmp.lt.s32.totalorder %s17, 1
        %s152 = scalar_select %p151, %s17, 1
        %s153 = smul.addr %s152, 12
        %s154 = smul.addr %s153, 8
        %s155 = scalar_lea.vmem %s1, %s154
        %v156 = vld [vmem:[%s155] sm:$0xff]
        %v157 = vld [vmem:[%s155 + $0x8] sm:$0xff]
        %v158 = vld [vmem:[%s155 + $0x10] sm:$0x3f]
        %s159 = scalar_lea.vmem %s155, 24
        %v160 = vld [vmem:[%s159] sm:$0xff]
        %v161 = vld [vmem:[%s159 + $0x8] sm:$0xff]
        %v162 = vld [vmem:[%s159 + $0x10] sm:$0x3f]
        %v163 = vmax.f32 %v156, %v160
        %v164 = vmax.f32 %v157, %v161
        %v165 = vmax.f32 %v158, %v162
        %v166 = vadd.f32 %v156, %v160
        %v167 = vadd.f32 %v157, %v161
        %v168 = vadd.f32 %v158, %v162
        %s169 = scalar_lea.vmem %s155, 48
        %v170 = vld [vmem:[%s169] sm:$0xff]
        %v171 = vld [vmem:[%s169 + $0x8] sm:$0xff]
        %v172 = vld [vmem:[%s169 + $0x10] sm:$0x3f]
        %v173 = vmax.f32 %v163, %v170
        %v174 = vmax.f32 %v164, %v171
        %v175 = vmax.f32 %v165, %v172
        %v176 = vadd.f32 %v166, %v170
        %v177 = vadd.f32 %v167, %v171
        %v178 = vadd.f32 %v168, %v172
        %s179 = scalar_lea.vmem %s155, 72
        %v180 = vld [vmem:[%s179] sm:$0xff]
        %v181 = vld [vmem:[%s179 + $0x8] sm:$0xff]
        %v182 = vld [vmem:[%s179 + $0x10] sm:$0x3f]
        %v183 = vmax.f32 %v173, %v180
        %v184 = vmax.f32 %v174, %v181
        %v185 = vmax.f32 %v175, %v182
        %v186 = vadd.f32 %v176, %v180
        %v187 = vadd.f32 %v177, %v181
        %v188 = vadd.f32 %v178, %v182
        %s189 = sld [smem:[#allocation2]]
        %v190 = vstv %s189
        %v191 = vmul.f32 %v190, %v183
        %v192 = vmul.f32 %v190, %v184
        %v193 = vadd.f32 %v191, 0.0
        %v194 = vadd.f32 %v192, 0.0
        %s195 = sld [smem:[#allocation2 + $0x1]]
        %v196 = vstv %s195
        %v197 = vmul.f32 %v196, %v183
        %v198 = vmul.f32 %v196, %v184
        %v199 = vadd.f32 %v197, 0.0
        %v200 = vadd.f32 %v198, 0.0
        %s201 = sld [smem:[#allocation2 + $0x2]]
        %v202 = vstv %s201
        %v203 = vmul.f32 %v202, %v183
        %v204 = vmul.f32 %v202, %v184
        %v205 = vadd.f32 %v203, 0.0
        %v206 = vadd.f32 %v204, 0.0
        %s207 = sld [smem:[#allocation2 + $0x3]]
        %v208 = vstv %s207
        %v209 = vmul.f32 %v208, %v183
        %v210 = vmul.f32 %v208, %v184
        %v211 = vadd.f32 %v209, 0.0
        %v212 = vadd.f32 %v210, 0.0
        %s213 = sld [smem:[#allocation2 + $0x4]]
        %v214 = vstv %s213
        %v215 = vmul.f32 %v214, %v183
        %v216 = vmul.f32 %v214, %v184
        %v217 = vadd.f32 %v215, 0.0
        %v218 = vadd.f32 %v216, 0.0
        %s219 = sld [smem:[#allocation2 + $0x5]]
        %v220 = vstv %s219
        %v221 = vmul.f32 %v220, %v183
        %v222 = vmul.f32 %v220, %v184
        %v223 = vadd.f32 %v221, 0.0
        %v224 = vadd.f32 %v222, 0.0
        %s225 = sld [smem:[#allocation2 + $0x6]]
        %v226 = vstv %s225
        %v227 = vmul.f32 %v226, %v183
        %v228 = vmul.f32 %v226, %v184
        %v229 = vadd.f32 %v227, 0.0
        %v230 = vadd.f32 %v228, 0.0
        %s231 = sld [smem:[#allocation2 + $0x7]]
        %v232 = vstv %s231
        %v233 = vmul.f32 %v232, %v183
        %v234 = vmul.f32 %v232, %v184
        %v235 = vmul.f32 %v232, %v185
        %vm239 = vcmask 1046528
        %v240 = vrot.slane %v233, 1
        %v241 = vrot.slane %v234, 1
        %v242 = vsel %vm239, %v240, %v241
        %v243 = vrot.slane %v235, 1
        %v244 = vsel %vm239, %v241, %v243
        %v247 = vadd.f32 %v193, %v242
        %v248 = vadd.f32 %v194, %v244
        %s249 = sld [smem:[#allocation2 + $0x8]]
        %v250 = vstv %s249
        %v251 = vmul.f32 %v250, %v183
        %v252 = vmul.f32 %v250, %v184
        %v253 = vmul.f32 %v250, %v185
        %v257 = vrot.slane %v251, 1
        %v258 = vrot.slane %v252, 1
        %v259 = vsel %vm239, %v257, %v258
        %v260 = vrot.slane %v253, 1
        %v261 = vsel %vm239, %v258, %v260
        %v264 = vadd.f32 %v199, %v259
        %v265 = vadd.f32 %v200, %v261
        %s266 = sld [smem:[#allocation2 + $0x9]]
        %v267 = vstv %s266
        %v268 = vmul.f32 %v267, %v183
        %v269 = vmul.f32 %v267, %v184
        %v270 = vmul.f32 %v267, %v185
        %v274 = vrot.slane %v268, 1
        %v275 = vrot.slane %v269, 1
        %v276 = vsel %vm239, %v274, %v275
        %v277 = vrot.slane %v270, 1
        %v278 = vsel %vm239, %v275, %v277
        %v281 = vadd.f32 %v205, %v276
        %v282 = vadd.f32 %v206, %v278
        %s283 = sld [smem:[#allocation2 + $0xa]]
        %v284 = vstv %s283
        %v285 = vmul.f32 %v284, %v183
        %v286 = vmul.f32 %v284, %v184
        %v287 = vmul.f32 %v284, %v185
        %v291 = vrot.slane %v285, 1
        %v292 = vrot.slane %v286, 1
        %v293 = vsel %vm239, %v291, %v292
        %v294 = vrot.slane %v287, 1
        %v295 = vsel %vm239, %v292, %v294
        %v298 = vadd.f32 %v211, %v293
        %v299 = vadd.f32 %v212, %v295
        %s300 = sld [smem:[#allocation2 + $0xb]]
        %v301 = vstv %s300
        %v302 = vmul.f32 %v301, %v183
        %v303 = vmul.f32 %v301, %v184
        %v304 = vmul.f32 %v301, %v185
        %v308 = vrot.slane %v302, 1
        %v309 = vrot.slane %v303, 1
        %v310 = vsel %vm239, %v308, %v309
        %v311 = vrot.slane %v304, 1
        %v312 = vsel %vm239, %v309, %v311
        %v315 = vadd.f32 %v217, %v310
        %v316 = vadd.f32 %v218, %v312
        %s317 = sld [smem:[#allocation2 + $0xc]]
        %v318 = vstv %s317
        %v319 = vmul.f32 %v318, %v183
        %v320 = vmul.f32 %v318, %v184
        %v321 = vmul.f32 %v318, %v185
        %v325 = vrot.slane %v319, 1
        %v326 = vrot.slane %v320, 1
        %v327 = vsel %vm239, %v325, %v326
        %v328 = vrot.slane %v321, 1
        %v329 = vsel %vm239, %v326, %v328
        %v332 = vadd.f32 %v223, %v327
        %v333 = vadd.f32 %v224, %v329
        %s334 = sld [smem:[#allocation2 + $0xd]]
        %v335 = vstv %s334
        %v336 = vmul.f32 %v335, %v183
        %v337 = vmul.f32 %v335, %v184
        %v338 = vmul.f32 %v335, %v185
        %v342 = vrot.slane %v336, 1
        %v343 = vrot.slane %v337, 1
        %v344 = vsel %vm239, %v342, %v343
        %v345 = vrot.slane %v338, 1
        %v346 = vsel %vm239, %v343, %v345
        %v349 = vadd.f32 %v229, %v344
        %v350 = vadd.f32 %v230, %v346
        %s351 = sld [smem:[#allocation2 + $0xe]]
        %v352 = vstv %s351
        %v353 = vmul.f32 %v352, %v183
        %v354 = vmul.f32 %v352, %v184
        %v355 = vmul.f32 %v352, %v185
        %vm359 = vcmask 1045504
        %v360 = vrot.slane %v353, 2
        %v361 = vrot.slane %v354, 2
        %v362 = vsel %vm359, %v360, %v361
        %v363 = vrot.slane %v355, 2
        %v364 = vsel %vm359, %v361, %v363
        %v367 = vadd.f32 %v247, %v362
        %v368 = vadd.f32 %v248, %v364
        %s369 = sld [smem:[#allocation2 + $0xf]]
        %v370 = vstv %s369
        %v371 = vmul.f32 %v370, %v183
        %v372 = vmul.f32 %v370, %v184
        %v373 = vmul.f32 %v370, %v185
        %v377 = vrot.slane %v371, 2
        %v378 = vrot.slane %v372, 2
        %v379 = vsel %vm359, %v377, %v378
        %v380 = vrot.slane %v373, 2
        %v381 = vsel %vm359, %v378, %v380
        %v384 = vadd.f32 %v264, %v379
        %v385 = vadd.f32 %v265, %v381
        %s386 = sld [smem:[#allocation2 + $0x10]]
        %v387 = vstv %s386
        %v388 = vmul.f32 %v387, %v183
        %v389 = vmul.f32 %v387, %v184
        %v390 = vmul.f32 %v387, %v185
        %v394 = vrot.slane %v388, 2
        %v395 = vrot.slane %v389, 2
        %v396 = vsel %vm359, %v394, %v395
        %v397 = vrot.slane %v390, 2
        %v398 = vsel %vm359, %v395, %v397
        %v401 = vadd.f32 %v281, %v396
        %v402 = vadd.f32 %v282, %v398
        %s403 = sld [smem:[#allocation2 + $0x11]]
        %v404 = vstv %s403
        %v405 = vmul.f32 %v404, %v183
        %v406 = vmul.f32 %v404, %v184
        %v407 = vmul.f32 %v404, %v185
        %v411 = vrot.slane %v405, 2
        %v412 = vrot.slane %v406, 2
        %v413 = vsel %vm359, %v411, %v412
        %v414 = vrot.slane %v407, 2
        %v415 = vsel %vm359, %v412, %v414
        %v418 = vadd.f32 %v298, %v413
        %v419 = vadd.f32 %v299, %v415
        %s420 = sld [smem:[#allocation2 + $0x12]]
        %v421 = vstv %s420
        %v422 = vmul.f32 %v421, %v183
        %v423 = vmul.f32 %v421, %v184
        %v424 = vmul.f32 %v421, %v185
        %v428 = vrot.slane %v422, 2
        %v429 = vrot.slane %v423, 2
        %v430 = vsel %vm359, %v428, %v429
        %v431 = vrot.slane %v424, 2
        %v432 = vsel %vm359, %v429, %v431
        %v435 = vadd.f32 %v315, %v430
        %v436 = vadd.f32 %v316, %v432
        %s437 = sld [smem:[#allocation2 + $0x13]]
        %v438 = vstv %s437
        %v439 = vmul.f32 %v438, %v183
        %v440 = vmul.f32 %v438, %v184
        %v441 = vmul.f32 %v438, %v185
        %v445 = vrot.slane %v439, 2
        %v446 = vrot.slane %v440, 2
        %v447 = vsel %vm359, %v445, %v446
        %v448 = vrot.slane %v441, 2
        %v449 = vsel %vm359, %v446, %v448
        %v452 = vadd.f32 %v332, %v447
        %v453 = vadd.f32 %v333, %v449
        %s454 = sld [smem:[#allocation2 + $0x14]]
        %v455 = vstv %s454
        %v456 = vmul.f32 %v455, %v183
        %v457 = vmul.f32 %v455, %v184
        %v458 = vmul.f32 %v455, %v185
        %v462 = vrot.slane %v456, 2
        %v463 = vrot.slane %v457, 2
        %v464 = vsel %vm359, %v462, %v463
        %v465 = vrot.slane %v458, 2
        %v466 = vsel %vm359, %v463, %v465
        %v469 = vadd.f32 %v349, %v464
        %v470 = vadd.f32 %v350, %v466
        %s471 = sld [smem:[#allocation2 + $0x15]]
        %v472 = vstv %s471
        %v473 = vmul.f32 %v472, %v183
        %v474 = vmul.f32 %v472, %v184
        %v475 = vmul.f32 %v472, %v185
        %vm479 = vcmask 1044480
        %v480 = vrot.slane %v473, 3
        %v481 = vrot.slane %v474, 3
        %v482 = vsel %vm479, %v480, %v481
        %v483 = vrot.slane %v475, 3
        %v484 = vsel %vm479, %v481, %v483
        %v487 = vadd.f32 %v367, %v482
        %v488 = vadd.f32 %v368, %v484
        %s489 = sld [smem:[#allocation2 + $0x16]]
        %v490 = vstv %s489
        %v491 = vmul.f32 %v490, %v183
        %v492 = vmul.f32 %v490, %v184
        %v493 = vmul.f32 %v490, %v185
        %v497 = vrot.slane %v491, 3
        %v498 = vrot.slane %v492, 3
        %v499 = vsel %vm479, %v497, %v498
        %v500 = vrot.slane %v493, 3
        %v501 = vsel %vm479, %v498, %v500
        %v504 = vadd.f32 %v384, %v499
        %v505 = vadd.f32 %v385, %v501
        %s506 = sld [smem:[#allocation2 + $0x17]]
        %v507 = vstv %s506
        %v508 = vmul.f32 %v507, %v183
        %v509 = vmul.f32 %v507, %v184
        %v510 = vmul.f32 %v507, %v185
        %v514 = vrot.slane %v508, 3
        %v515 = vrot.slane %v509, 3
        %v516 = vsel %vm479, %v514, %v515
        %v517 = vrot.slane %v510, 3
        %v518 = vsel %vm479, %v515, %v517
        %v521 = vadd.f32 %v401, %v516
        %v522 = vadd.f32 %v402, %v518
        %s523 = sld [smem:[#allocation2 + $0x18]]
        %v524 = vstv %s523
        %v525 = vmul.f32 %v524, %v183
        %v526 = vmul.f32 %v524, %v184
        %v527 = vmul.f32 %v524, %v185
        %v531 = vrot.slane %v525, 3
        %v532 = vrot.slane %v526, 3
        %v533 = vsel %vm479, %v531, %v532
        %v534 = vrot.slane %v527, 3
        %v535 = vsel %vm479, %v532, %v534
        %v538 = vadd.f32 %v418, %v533
        %v539 = vadd.f32 %v419, %v535
        %s540 = sld [smem:[#allocation2 + $0x19]]
        %v541 = vstv %s540
        %v542 = vmul.f32 %v541, %v183
        %v543 = vmul.f32 %v541, %v184
        %v544 = vmul.f32 %v541, %v185
        %v548 = vrot.slane %v542, 3
        %v549 = vrot.slane %v543, 3
        %v550 = vsel %vm479, %v548, %v549
        %v551 = vrot.slane %v544, 3
        %v552 = vsel %vm479, %v549, %v551
        %v555 = vadd.f32 %v435, %v550
        %v556 = vadd.f32 %v436, %v552
        %s557 = sld [smem:[#allocation2 + $0x1a]]
        %v558 = vstv %s557
        %v559 = vmul.f32 %v558, %v183
        %v560 = vmul.f32 %v558, %v184
        %v561 = vmul.f32 %v558, %v185
        %v565 = vrot.slane %v559, 3
        %v566 = vrot.slane %v560, 3
        %v567 = vsel %vm479, %v565, %v566
        %v568 = vrot.slane %v561, 3
        %v569 = vsel %vm479, %v566, %v568
        %v572 = vadd.f32 %v452, %v567
        %v573 = vadd.f32 %v453, %v569
        %s574 = sld [smem:[#allocation2 + $0x1b]]
        %v575 = vstv %s574
        %v576 = vmul.f32 %v575, %v183
        %v577 = vmul.f32 %v575, %v184
        %v578 = vmul.f32 %v575, %v185
        %v582 = vrot.slane %v576, 3
        %v583 = vrot.slane %v577, 3
        %v584 = vsel %vm479, %v582, %v583
        %v585 = vrot.slane %v578, 3
        %v586 = vsel %vm479, %v583, %v585
        %v589 = vadd.f32 %v469, %v584
        %v590 = vadd.f32 %v470, %v586
        %s591 = sld [smem:[#allocation2 + $0x1c]]
        %v592 = vstv %s591
        %v593 = vmul.f32 %v592, %v183
        %v594 = vmul.f32 %v592, %v184
        %v595 = vmul.f32 %v592, %v185
        %vm599 = vcmask 1043456
        %v600 = vrot.slane %v593, 4
        %v601 = vrot.slane %v594, 4
        %v602 = vsel %vm599, %v600, %v601
        %v603 = vrot.slane %v595, 4
        %v604 = vsel %vm599, %v601, %v603
        %v607 = vadd.f32 %v487, %v602
        %v608 = vadd.f32 %v488, %v604
        %s609 = sld [smem:[#allocation2 + $0x1d]]
        %v610 = vstv %s609
        %v611 = vmul.f32 %v610, %v183
        %v612 = vmul.f32 %v610, %v184
        %v613 = vmul.f32 %v610, %v185
        %v617 = vrot.slane %v611, 4
        %v618 = vrot.slane %v612, 4
        %v619 = vsel %vm599, %v617, %v618
        %v620 = vrot.slane %v613, 4
        %v621 = vsel %vm599, %v618, %v620
        %v624 = vadd.f32 %v504, %v619
        %v625 = vadd.f32 %v505, %v621
        %s626 = sld [smem:[#allocation2 + $0x1e]]
        %v627 = vstv %s626
        %v628 = vmul.f32 %v627, %v183
        %v629 = vmul.f32 %v627, %v184
        %v630 = vmul.f32 %v627, %v185
        %v634 = vrot.slane %v628, 4
        %v635 = vrot.slane %v629, 4
        %v636 = vsel %vm599, %v634, %v635
        %v637 = vrot.slane %v630, 4
        %v638 = vsel %vm599, %v635, %v637
        %v641 = vadd.f32 %v521, %v636
        %v642 = vadd.f32 %v522, %v638
        %s643 = sld [smem:[#allocation2 + $0x1f]]
        %v644 = vstv %s643
        %v645 = vmul.f32 %v644, %v183
        %v646 = vmul.f32 %v644, %v184
        %v647 = vmul.f32 %v644, %v185
        %v651 = vrot.slane %v645, 4
        %v652 = vrot.slane %v646, 4
        %v653 = vsel %vm599, %v651, %v652
        %v654 = vrot.slane %v647, 4
        %v655 = vsel %vm599, %v652, %v654
        %v658 = vadd.f32 %v538, %v653
        %v659 = vadd.f32 %v539, %v655
        %s660 = sld [smem:[#allocation2 + $0x20]]
        %v661 = vstv %s660
        %v662 = vmul.f32 %v661, %v183
        %v663 = vmul.f32 %v661, %v184
        %v664 = vmul.f32 %v661, %v185
        %v668 = vrot.slane %v662, 4
        %v669 = vrot.slane %v663, 4
        %v670 = vsel %vm599, %v668, %v669
        %v671 = vrot.slane %v664, 4
        %v672 = vsel %vm599, %v669, %v671
        %v675 = vadd.f32 %v555, %v670
        %v676 = vadd.f32 %v556, %v672
        %s677 = sld [smem:[#allocation2 + $0x21]]
        %v678 = vstv %s677
        %v679 = vmul.f32 %v678, %v183
        %v680 = vmul.f32 %v678, %v184
        %v681 = vmul.f32 %v678, %v185
        %v685 = vrot.slane %v679, 4
        %v686 = vrot.slane %v680, 4
        %v687 = vsel %vm599, %v685, %v686
        %v688 = vrot.slane %v681, 4
        %v689 = vsel %vm599, %v686, %v688
        %v692 = vadd.f32 %v572, %v687
        %v693 = vadd.f32 %v573, %v689
        %s694 = sld [smem:[#allocation2 + $0x22]]
        %v695 = vstv %s694
        %v696 = vmul.f32 %v695, %v183
        %v697 = vmul.f32 %v695, %v184
        %v698 = vmul.f32 %v695, %v185
        %v702 = vrot.slane %v696, 4
        %v703 = vrot.slane %v697, 4
        %v704 = vsel %vm599, %v702, %v703
        %v705 = vrot.slane %v698, 4
        %v706 = vsel %vm599, %v703, %v705
        %v709 = vadd.f32 %v589, %v704
        %v710 = vadd.f32 %v590, %v706
        %s711 = sld [smem:[#allocation2 + $0x23]]
        %v712 = vstv %s711
        %v713 = vmul.f32 %v712, %v183
        %v714 = vmul.f32 %v712, %v184
        %v715 = vmul.f32 %v712, %v185
        %vm719 = vcmask 1042432
        %v720 = vrot.slane %v713, 5
        %v721 = vrot.slane %v714, 5
        %v722 = vsel %vm719, %v720, %v721
        %v723 = vrot.slane %v715, 5
        %v724 = vsel %vm719, %v721, %v723
        %v727 = vadd.f32 %v607, %v722
        %v728 = vadd.f32 %v608, %v724
        %s729 = sld [smem:[#allocation2 + $0x24]]
        %v730 = vstv %s729
        %v731 = vmul.f32 %v730, %v183
        %v732 = vmul.f32 %v730, %v184
        %v733 = vmul.f32 %v730, %v185
        %v737 = vrot.slane %v731, 5
        %v738 = vrot.slane %v732, 5
        %v739 = vsel %vm719, %v737, %v738
        %v740 = vrot.slane %v733, 5
        %v741 = vsel %vm719, %v738, %v740
        %v744 = vadd.f32 %v624, %v739
        %v745 = vadd.f32 %v625, %v741
        %s746 = sld [smem:[#allocation2 + $0x25]]
        %v747 = vstv %s746
        %v748 = vmul.f32 %v747, %v183
        %v749 = vmul.f32 %v747, %v184
        %v750 = vmul.f32 %v747, %v185
        %v754 = vrot.slane %v748, 5
        %v755 = vrot.slane %v749, 5
        %v756 = vsel %vm719, %v754, %v755
        %v757 = vrot.slane %v750, 5
        %v758 = vsel %vm719, %v755, %v757
        %v761 = vadd.f32 %v641, %v756
        %v762 = vadd.f32 %v642, %v758
        %s763 = sld [smem:[#allocation2 + $0x26]]
        %v764 = vstv %s763
        %v765 = vmul.f32 %v764, %v183
        %v766 = vmul.f32 %v764, %v184
        %v767 = vmul.f32 %v764, %v185
        %v771 = vrot.slane %v765, 5
        %v772 = vrot.slane %v766, 5
        %v773 = vsel %vm719, %v771, %v772
        %v774 = vrot.slane %v767, 5
        %v775 = vsel %vm719, %v772, %v774
        %v778 = vadd.f32 %v658, %v773
        %v779 = vadd.f32 %v659, %v775
        %s780 = sld [smem:[#allocation2 + $0x27]]
        %v781 = vstv %s780
        %v782 = vmul.f32 %v781, %v183
        %v783 = vmul.f32 %v781, %v184
        %v784 = vmul.f32 %v781, %v185
        %v788 = vrot.slane %v782, 5
        %v789 = vrot.slane %v783, 5
        %v790 = vsel %vm719, %v788, %v789
        %v791 = vrot.slane %v784, 5
        %v792 = vsel %vm719, %v789, %v791
        %v795 = vadd.f32 %v675, %v790
        %v796 = vadd.f32 %v676, %v792
        %s797 = sld [smem:[#allocation2 + $0x28]]
        %v798 = vstv %s797
        %v799 = vmul.f32 %v798, %v183
        %v800 = vmul.f32 %v798, %v184
        %v801 = vmul.f32 %v798, %v185
        %v805 = vrot.slane %v799, 5
        %v806 = vrot.slane %v800, 5
        %v807 = vsel %vm719, %v805, %v806
        %v808 = vrot.slane %v801, 5
        %v809 = vsel %vm719, %v806, %v808
        %v812 = vadd.f32 %v692, %v807
        %v813 = vadd.f32 %v693, %v809
        %s814 = sld [smem:[#allocation2 + $0x29]]
        %v815 = vstv %s814
        %v816 = vmul.f32 %v815, %v183
        %v817 = vmul.f32 %v815, %v184
        %v818 = vmul.f32 %v815, %v185
        %v822 = vrot.slane %v816, 5
        %v823 = vrot.slane %v817, 5
        %v824 = vsel %vm719, %v822, %v823
        %v825 = vrot.slane %v818, 5
        %v826 = vsel %vm719, %v823, %v825
        %v829 = vadd.f32 %v709, %v824
        %v830 = vadd.f32 %v710, %v826
        %s831 = sld [smem:[#allocation2 + $0x2a]]
        %v832 = vstv %s831
        %v833 = vmul.f32 %v832, %v183
        %v834 = vmul.f32 %v832, %v184
        %v835 = vmul.f32 %v832, %v185
        %vm839 = vcmask 1041408
        %v840 = vrot.slane %v833, 6
        %v841 = vrot.slane %v834, 6
        %v842 = vsel %vm839, %v840, %v841
        %v843 = vrot.slane %v835, 6
        %v844 = vsel %vm839, %v841, %v843
        %v847 = vadd.f32 %v727, %v842
        %v848 = vadd.f32 %v728, %v844
        %s849 = sld [smem:[#allocation2 + $0x2b]]
        %v850 = vstv %s849
        %v851 = vmul.f32 %v850, %v183
        %v852 = vmul.f32 %v850, %v184
        %v853 = vmul.f32 %v850, %v185
        %v857 = vrot.slane %v851, 6
        %v858 = vrot.slane %v852, 6
        %v859 = vsel %vm839, %v857, %v858
        %v860 = vrot.slane %v853, 6
        %v861 = vsel %vm839, %v858, %v860
        %v864 = vadd.f32 %v744, %v859
        %v865 = vadd.f32 %v745, %v861
        %s866 = sld [smem:[#allocation2 + $0x2c]]
        %v867 = vstv %s866
        %v868 = vmul.f32 %v867, %v183
        %v869 = vmul.f32 %v867, %v184
        %v870 = vmul.f32 %v867, %v185
        %v874 = vrot.slane %v868, 6
        %v875 = vrot.slane %v869, 6
        %v876 = vsel %vm839, %v874, %v875
        %v877 = vrot.slane %v870, 6
        %v878 = vsel %vm839, %v875, %v877
        %v881 = vadd.f32 %v761, %v876
        %v882 = vadd.f32 %v762, %v878
        %s883 = sld [smem:[#allocation2 + $0x2d]]
        %v884 = vstv %s883
        %v885 = vmul.f32 %v884, %v183
        %v886 = vmul.f32 %v884, %v184
        %v887 = vmul.f32 %v884, %v185
        %v891 = vrot.slane %v885, 6
        %v892 = vrot.slane %v886, 6
        %v893 = vsel %vm839, %v891, %v892
        %v894 = vrot.slane %v887, 6
        %v895 = vsel %vm839, %v892, %v894
        %v898 = vadd.f32 %v778, %v893
        %v899 = vadd.f32 %v779, %v895
        %s900 = sld [smem:[#allocation2 + $0x2e]]
        %v901 = vstv %s900
        %v902 = vmul.f32 %v901, %v183
        %v903 = vmul.f32 %v901, %v184
        %v904 = vmul.f32 %v901, %v185
        %v908 = vrot.slane %v902, 6
        %v909 = vrot.slane %v903, 6
        %v910 = vsel %vm839, %v908, %v909
        %v911 = vrot.slane %v904, 6
        %v912 = vsel %vm839, %v909, %v911
        %v915 = vadd.f32 %v795, %v910
        %v916 = vadd.f32 %v796, %v912
        %s917 = sld [smem:[#allocation2 + $0x2f]]
        %v918 = vstv %s917
        %v919 = vmul.f32 %v918, %v183
        %v920 = vmul.f32 %v918, %v184
        %v921 = vmul.f32 %v918, %v185
        %v925 = vrot.slane %v919, 6
        %v926 = vrot.slane %v920, 6
        %v927 = vsel %vm839, %v925, %v926
        %v928 = vrot.slane %v921, 6
        %v929 = vsel %vm839, %v926, %v928
        %v932 = vadd.f32 %v812, %v927
        %v933 = vadd.f32 %v813, %v929
        %s934 = sld [smem:[#allocation2 + $0x30]]
        %v935 = vstv %s934
        %v936 = vmul.f32 %v935, %v183
        %v937 = vmul.f32 %v935, %v184
        %v938 = vmul.f32 %v935, %v185
        %v942 = vrot.slane %v936, 6
        %v943 = vrot.slane %v937, 6
        %v944 = vsel %vm839, %v942, %v943
        %v945 = vrot.slane %v938, 6
        %v946 = vsel %vm839, %v943, %v945
        %v949 = vadd.f32 %v829, %v944
        %v950 = vadd.f32 %v830, %v946
        %s951 = sld [smem:[#allocation2 + $0x31]]
        %v952 = vstv %s951
        %v953 = vmul.f32 %v952, %v186
        %v954 = vmul.f32 %v952, %v187
        %v955 = vadd.f32 %v847, %v953
        %v956 = vadd.f32 %v848, %v954
        %s957 = sld [smem:[#allocation2 + $0x32]]
        %v958 = vstv %s957
        %v959 = vmul.f32 %v958, %v186
        %v960 = vmul.f32 %v958, %v187
        %v961 = vadd.f32 %v864, %v959
        %v962 = vadd.f32 %v865, %v960
        %s963 = sld [smem:[#allocation2 + $0x33]]
        %v964 = vstv %s963
        %v965 = vmul.f32 %v964, %v186
        %v966 = vmul.f32 %v964, %v187
        %v967 = vadd.f32 %v881, %v965
        %v968 = vadd.f32 %v882, %v966
        %s969 = sld [smem:[#allocation2 + $0x34]]
        %v970 = vstv %s969
        %v971 = vmul.f32 %v970, %v186
        %v972 = vmul.f32 %v970, %v187
        %v973 = vadd.f32 %v898, %v971
        %v974 = vadd.f32 %v899, %v972
        %s975 = sld [smem:[#allocation2 + $0x35]]
        %v976 = vstv %s975
        %v977 = vmul.f32 %v976, %v186
        %v978 = vmul.f32 %v976, %v187
        %v979 = vadd.f32 %v915, %v977
        %v980 = vadd.f32 %v916, %v978
        %s981 = sld [smem:[#allocation2 + $0x36]]
        %v982 = vstv %s981
        %v983 = vmul.f32 %v982, %v186
        %v984 = vmul.f32 %v982, %v187
        %v985 = vadd.f32 %v932, %v983
        %v986 = vadd.f32 %v933, %v984
        %s987 = sld [smem:[#allocation2 + $0x37]]
        %v988 = vstv %s987
        %v989 = vmul.f32 %v988, %v186
        %v990 = vmul.f32 %v988, %v187
        %v991 = vadd.f32 %v949, %v989
        %v992 = vadd.f32 %v950, %v990
        %s993 = sld [smem:[#allocation2 + $0x38]]
        %v994 = vstv %s993
        %v995 = vmul.f32 %v994, %v186
        %v996 = vmul.f32 %v994, %v187
        %v997 = vmul.f32 %v994, %v188
        %v1001 = vrot.slane %v995, 1
        %v1002 = vrot.slane %v996, 1
        %v1003 = vsel %vm239, %v1001, %v1002
        %v1004 = vrot.slane %v997, 1
        %v1005 = vsel %vm239, %v1002, %v1004
        %v1008 = vadd.f32 %v955, %v1003
        %v1009 = vadd.f32 %v956, %v1005
        %s1010 = sld [smem:[#allocation2 + $0x39]]
        %v1011 = vstv %s1010
        %v1012 = vmul.f32 %v1011, %v186
        %v1013 = vmul.f32 %v1011, %v187
        %v1014 = vmul.f32 %v1011, %v188
        %v1018 = vrot.slane %v1012, 1
        %v1019 = vrot.slane %v1013, 1
        %v1020 = vsel %vm239, %v1018, %v1019
        %v1021 = vrot.slane %v1014, 1
        %v1022 = vsel %vm239, %v1019, %v1021
        %v1025 = vadd.f32 %v961, %v1020
        %v1026 = vadd.f32 %v962, %v1022
        %s1027 = sld [smem:[#allocation2 + $0x3a]]
        %v1028 = vstv %s1027
        %v1029 = vmul.f32 %v1028, %v186
        %v1030 = vmul.f32 %v1028, %v187
        %v1031 = vmul.f32 %v1028, %v188
        %v1035 = vrot.slane %v1029, 1
        %v1036 = vrot.slane %v1030, 1
        %v1037 = vsel %vm239, %v1035, %v1036
        %v1038 = vrot.slane %v1031, 1
        %v1039 = vsel %vm239, %v1036, %v1038
        %v1042 = vadd.f32 %v967, %v1037
        %v1043 = vadd.f32 %v968, %v1039
        %s1044 = sld [smem:[#allocation2 + $0x3b]]
        %v1045 = vstv %s1044
        %v1046 = vmul.f32 %v1045, %v186
        %v1047 = vmul.f32 %v1045, %v187
        %v1048 = vmul.f32 %v1045, %v188
        %v1052 = vrot.slane %v1046, 1
        %v1053 = vrot.slane %v1047, 1
        %v1054 = vsel %vm239, %v1052, %v1053
        %v1055 = vrot.slane %v1048, 1
        %v1056 = vsel %vm239, %v1053, %v1055
        %v1059 = vadd.f32 %v973, %v1054
        %v1060 = vadd.f32 %v974, %v1056
        %s1061 = sld [smem:[#allocation2 + $0x3c]]
        %v1062 = vstv %s1061
        %v1063 = vmul.f32 %v1062, %v186
        %v1064 = vmul.f32 %v1062, %v187
        %v1065 = vmul.f32 %v1062, %v188
        %v1069 = vrot.slane %v1063, 1
        %v1070 = vrot.slane %v1064, 1
        %v1071 = vsel %vm239, %v1069, %v1070
        %v1072 = vrot.slane %v1065, 1
        %v1073 = vsel %vm239, %v1070, %v1072
        %v1076 = vadd.f32 %v979, %v1071
        %v1077 = vadd.f32 %v980, %v1073
        %s1078 = sld [smem:[#allocation2 + $0x3d]]
        %v1079 = vstv %s1078
        %v1080 = vmul.f32 %v1079, %v186
        %v1081 = vmul.f32 %v1079, %v187
        %v1082 = vmul.f32 %v1079, %v188
        %v1086 = vrot.slane %v1080, 1
        %v1087 = vrot.slane %v1081, 1
        %v1088 = vsel %vm239, %v1086, %v1087
        %v1089 = vrot.slane %v1082, 1
        %v1090 = vsel %vm239, %v1087, %v1089
        %v1093 = vadd.f32 %v985, %v1088
        %v1094 = vadd.f32 %v986, %v1090
        %s1095 = sld [smem:[#allocation2 + $0x3e]]
        %v1096 = vstv %s1095
        %v1097 = vmul.f32 %v1096, %v186
        %v1098 = vmul.f32 %v1096, %v187
        %v1099 = vmul.f32 %v1096, %v188
        %v1103 = vrot.slane %v1097, 1
        %v1104 = vrot.slane %v1098, 1
        %v1105 = vsel %vm239, %v1103, %v1104
        %v1106 = vrot.slane %v1099, 1
        %v1107 = vsel %vm239, %v1104, %v1106
        %v1110 = vadd.f32 %v991, %v1105
        %v1111 = vadd.f32 %v992, %v1107
        %s1112 = sld [smem:[#allocation2 + $0x3f]]
        %v1113 = vstv %s1112
        %v1114 = vmul.f32 %v1113, %v186
        %v1115 = vmul.f32 %v1113, %v187
        %v1116 = vmul.f32 %v1113, %v188
        %v1120 = vrot.slane %v1114, 2
        %v1121 = vrot.slane %v1115, 2
        %v1122 = vsel %vm359, %v1120, %v1121
        %v1123 = vrot.slane %v1116, 2
        %v1124 = vsel %vm359, %v1121, %v1123
        %v1127 = vadd.f32 %v1008, %v1122
        %v1128 = vadd.f32 %v1009, %v1124
        %s1129 = sld [smem:[#allocation2 + $0x40]]
        %v1130 = vstv %s1129
        %v1131 = vmul.f32 %v1130, %v186
        %v1132 = vmul.f32 %v1130, %v187
        %v1133 = vmul.f32 %v1130, %v188
        %v1137 = vrot.slane %v1131, 2
        %v1138 = vrot.slane %v1132, 2
        %v1139 = vsel %vm359, %v1137, %v1138
        %v1140 = vrot.slane %v1133, 2
        %v1141 = vsel %vm359, %v1138, %v1140
        %v1144 = vadd.f32 %v1025, %v1139
        %v1145 = vadd.f32 %v1026, %v1141
        %s1146 = sld [smem:[#allocation2 + $0x41]]
        %v1147 = vstv %s1146
        %v1148 = vmul.f32 %v1147, %v186
        %v1149 = vmul.f32 %v1147, %v187
        %v1150 = vmul.f32 %v1147, %v188
        %v1154 = vrot.slane %v1148, 2
        %v1155 = vrot.slane %v1149, 2
        %v1156 = vsel %vm359, %v1154, %v1155
        %v1157 = vrot.slane %v1150, 2
        %v1158 = vsel %vm359, %v1155, %v1157
        %v1161 = vadd.f32 %v1042, %v1156
        %v1162 = vadd.f32 %v1043, %v1158
        %s1163 = sld [smem:[#allocation2 + $0x42]]
        %v1164 = vstv %s1163
        %v1165 = vmul.f32 %v1164, %v186
        %v1166 = vmul.f32 %v1164, %v187
        %v1167 = vmul.f32 %v1164, %v188
        %v1171 = vrot.slane %v1165, 2
        %v1172 = vrot.slane %v1166, 2
        %v1173 = vsel %vm359, %v1171, %v1172
        %v1174 = vrot.slane %v1167, 2
        %v1175 = vsel %vm359, %v1172, %v1174
        %v1178 = vadd.f32 %v1059, %v1173
        %v1179 = vadd.f32 %v1060, %v1175
        %s1180 = sld [smem:[#allocation2 + $0x43]]
        %v1181 = vstv %s1180
        %v1182 = vmul.f32 %v1181, %v186
        %v1183 = vmul.f32 %v1181, %v187
        %v1184 = vmul.f32 %v1181, %v188
        %v1188 = vrot.slane %v1182, 2
        %v1189 = vrot.slane %v1183, 2
        %v1190 = vsel %vm359, %v1188, %v1189
        %v1191 = vrot.slane %v1184, 2
        %v1192 = vsel %vm359, %v1189, %v1191
        %v1195 = vadd.f32 %v1076, %v1190
        %v1196 = vadd.f32 %v1077, %v1192
        %s1197 = sld [smem:[#allocation2 + $0x44]]
        %v1198 = vstv %s1197
        %v1199 = vmul.f32 %v1198, %v186
        %v1200 = vmul.f32 %v1198, %v187
        %v1201 = vmul.f32 %v1198, %v188
        %v1205 = vrot.slane %v1199, 2
        %v1206 = vrot.slane %v1200, 2
        %v1207 = vsel %vm359, %v1205, %v1206
        %v1208 = vrot.slane %v1201, 2
        %v1209 = vsel %vm359, %v1206, %v1208
        %v1212 = vadd.f32 %v1093, %v1207
        %v1213 = vadd.f32 %v1094, %v1209
        %s1214 = sld [smem:[#allocation2 + $0x45]]
        %v1215 = vstv %s1214
        %v1216 = vmul.f32 %v1215, %v186
        %v1217 = vmul.f32 %v1215, %v187
        %v1218 = vmul.f32 %v1215, %v188
        %v1222 = vrot.slane %v1216, 2
        %v1223 = vrot.slane %v1217, 2
        %v1224 = vsel %vm359, %v1222, %v1223
        %v1225 = vrot.slane %v1218, 2
        %v1226 = vsel %vm359, %v1223, %v1225
        %v1229 = vadd.f32 %v1110, %v1224
        %v1230 = vadd.f32 %v1111, %v1226
        %s1231 = sld [smem:[#allocation2 + $0x46]]
        %v1232 = vstv %s1231
        %v1233 = vmul.f32 %v1232, %v186
        %v1234 = vmul.f32 %v1232, %v187
        %v1235 = vmul.f32 %v1232, %v188
        %v1239 = vrot.slane %v1233, 3
        %v1240 = vrot.slane %v1234, 3
        %v1241 = vsel %vm479, %v1239, %v1240
        %v1242 = vrot.slane %v1235, 3
        %v1243 = vsel %vm479, %v1240, %v1242
        %v1246 = vadd.f32 %v1127, %v1241
        %v1247 = vadd.f32 %v1128, %v1243
        %s1248 = sld [smem:[#allocation2 + $0x47]]
        %v1249 = vstv %s1248
        %v1250 = vmul.f32 %v1249, %v186
        %v1251 = vmul.f32 %v1249, %v187
        %v1252 = vmul.f32 %v1249, %v188
        %v1256 = vrot.slane %v1250, 3
        %v1257 = vrot.slane %v1251, 3
        %v1258 = vsel %vm479, %v1256, %v1257
        %v1259 = vrot.slane %v1252, 3
        %v1260 = vsel %vm479, %v1257, %v1259
        %v1263 = vadd.f32 %v1144, %v1258
        %v1264 = vadd.f32 %v1145, %v1260
        %s1265 = sld [smem:[#allocation2 + $0x48]]
        %v1266 = vstv %s1265
        %v1267 = vmul.f32 %v1266, %v186
        %v1268 = vmul.f32 %v1266, %v187
        %v1269 = vmul.f32 %v1266, %v188
        %v1273 = vrot.slane %v1267, 3
        %v1274 = vrot.slane %v1268, 3
        %v1275 = vsel %vm479, %v1273, %v1274
        %v1276 = vrot.slane %v1269, 3
        %v1277 = vsel %vm479, %v1274, %v1276
        %v1280 = vadd.f32 %v1161, %v1275
        %v1281 = vadd.f32 %v1162, %v1277
        %s1282 = sld [smem:[#allocation2 + $0x49]]
        %v1283 = vstv %s1282
        %v1284 = vmul.f32 %v1283, %v186
        %v1285 = vmul.f32 %v1283, %v187
        %v1286 = vmul.f32 %v1283, %v188
        %v1290 = vrot.slane %v1284, 3
        %v1291 = vrot.slane %v1285, 3
        %v1292 = vsel %vm479, %v1290, %v1291
        %v1293 = vrot.slane %v1286, 3
        %v1294 = vsel %vm479, %v1291, %v1293
        %v1297 = vadd.f32 %v1178, %v1292
        %v1298 = vadd.f32 %v1179, %v1294
        %s1299 = sld [smem:[#allocation2 + $0x4a]]
        %v1300 = vstv %s1299
        %v1301 = vmul.f32 %v1300, %v186
        %v1302 = vmul.f32 %v1300, %v187
        %v1303 = vmul.f32 %v1300, %v188
        %v1307 = vrot.slane %v1301, 3
        %v1308 = vrot.slane %v1302, 3
        %v1309 = vsel %vm479, %v1307, %v1308
        %v1310 = vrot.slane %v1303, 3
        %v1311 = vsel %vm479, %v1308, %v1310
        %v1314 = vadd.f32 %v1195, %v1309
        %v1315 = vadd.f32 %v1196, %v1311
        %s1316 = sld [smem:[#allocation2 + $0x4b]]
        %v1317 = vstv %s1316
        %v1318 = vmul.f32 %v1317, %v186
        %v1319 = vmul.f32 %v1317, %v187
        %v1320 = vmul.f32 %v1317, %v188
        %v1324 = vrot.slane %v1318, 3
        %v1325 = vrot.slane %v1319, 3
        %v1326 = vsel %vm479, %v1324, %v1325
        %v1327 = vrot.slane %v1320, 3
        %v1328 = vsel %vm479, %v1325, %v1327
        %v1331 = vadd.f32 %v1212, %v1326
        %v1332 = vadd.f32 %v1213, %v1328
        %s1333 = sld [smem:[#allocation2 + $0x4c]]
        %v1334 = vstv %s1333
        %v1335 = vmul.f32 %v1334, %v186
        %v1336 = vmul.f32 %v1334, %v187
        %v1337 = vmul.f32 %v1334, %v188
        %v1341 = vrot.slane %v1335, 3
        %v1342 = vrot.slane %v1336, 3
        %v1343 = vsel %vm479, %v1341, %v1342
        %v1344 = vrot.slane %v1337, 3
        %v1345 = vsel %vm479, %v1342, %v1344
        %v1348 = vadd.f32 %v1229, %v1343
        %v1349 = vadd.f32 %v1230, %v1345
        %s1350 = sld [smem:[#allocation2 + $0x4d]]
        %v1351 = vstv %s1350
        %v1352 = vmul.f32 %v1351, %v186
        %v1353 = vmul.f32 %v1351, %v187
        %v1354 = vmul.f32 %v1351, %v188
        %v1358 = vrot.slane %v1352, 4
        %v1359 = vrot.slane %v1353, 4
        %v1360 = vsel %vm599, %v1358, %v1359
        %v1361 = vrot.slane %v1354, 4
        %v1362 = vsel %vm599, %v1359, %v1361
        %v1365 = vadd.f32 %v1246, %v1360
        %v1366 = vadd.f32 %v1247, %v1362
        %s1367 = sld [smem:[#allocation2 + $0x4e]]
        %v1368 = vstv %s1367
        %v1369 = vmul.f32 %v1368, %v186
        %v1370 = vmul.f32 %v1368, %v187
        %v1371 = vmul.f32 %v1368, %v188
        %v1375 = vrot.slane %v1369, 4
        %v1376 = vrot.slane %v1370, 4
        %v1377 = vsel %vm599, %v1375, %v1376
        %v1378 = vrot.slane %v1371, 4
        %v1379 = vsel %vm599, %v1376, %v1378
        %v1382 = vadd.f32 %v1263, %v1377
        %v1383 = vadd.f32 %v1264, %v1379
        %s1384 = sld [smem:[#allocation2 + $0x4f]]
        %v1385 = vstv %s1384
        %v1386 = vmul.f32 %v1385, %v186
        %v1387 = vmul.f32 %v1385, %v187
        %v1388 = vmul.f32 %v1385, %v188
        %v1392 = vrot.slane %v1386, 4
        %v1393 = vrot.slane %v1387, 4
        %v1394 = vsel %vm599, %v1392, %v1393
        %v1395 = vrot.slane %v1388, 4
        %v1396 = vsel %vm599, %v1393, %v1395
        %v1399 = vadd.f32 %v1280, %v1394
        %v1400 = vadd.f32 %v1281, %v1396
        %s1401 = sld [smem:[#allocation2 + $0x50]]
        %v1402 = vstv %s1401
        %v1403 = vmul.f32 %v1402, %v186
        %v1404 = vmul.f32 %v1402, %v187
        %v1405 = vmul.f32 %v1402, %v188
        %v1409 = vrot.slane %v1403, 4
        %v1410 = vrot.slane %v1404, 4
        %v1411 = vsel %vm599, %v1409, %v1410
        %v1412 = vrot.slane %v1405, 4
        %v1413 = vsel %vm599, %v1410, %v1412
        %v1416 = vadd.f32 %v1297, %v1411
        %v1417 = vadd.f32 %v1298, %v1413
        %s1418 = sld [smem:[#allocation2 + $0x51]]
        %v1419 = vstv %s1418
        %v1420 = vmul.f32 %v1419, %v186
        %v1421 = vmul.f32 %v1419, %v187
        %v1422 = vmul.f32 %v1419, %v188
        %v1426 = vrot.slane %v1420, 4
        %v1427 = vrot.slane %v1421, 4
        %v1428 = vsel %vm599, %v1426, %v1427
        %v1429 = vrot.slane %v1422, 4
        %v1430 = vsel %vm599, %v1427, %v1429
        %v1433 = vadd.f32 %v1314, %v1428
        %v1434 = vadd.f32 %v1315, %v1430
        %s1435 = sld [smem:[#allocation2 + $0x52]]
        %v1436 = vstv %s1435
        %v1437 = vmul.f32 %v1436, %v186
        %v1438 = vmul.f32 %v1436, %v187
        %v1439 = vmul.f32 %v1436, %v188
        %v1443 = vrot.slane %v1437, 4
        %v1444 = vrot.slane %v1438, 4
        %v1445 = vsel %vm599, %v1443, %v1444
        %v1446 = vrot.slane %v1439, 4
        %v1447 = vsel %vm599, %v1444, %v1446
        %v1450 = vadd.f32 %v1331, %v1445
        %v1451 = vadd.f32 %v1332, %v1447
        %s1452 = sld [smem:[#allocation2 + $0x53]]
        %v1453 = vstv %s1452
        %v1454 = vmul.f32 %v1453, %v186
        %v1455 = vmul.f32 %v1453, %v187
        %v1456 = vmul.f32 %v1453, %v188
        %v1460 = vrot.slane %v1454, 4
        %v1461 = vrot.slane %v1455, 4
        %v1462 = vsel %vm599, %v1460, %v1461
        %v1463 = vrot.slane %v1456, 4
        %v1464 = vsel %vm599, %v1461, %v1463
        %v1467 = vadd.f32 %v1348, %v1462
        %v1468 = vadd.f32 %v1349, %v1464
        %s1469 = sld [smem:[#allocation2 + $0x54]]
        %v1470 = vstv %s1469
        %v1471 = vmul.f32 %v1470, %v186
        %v1472 = vmul.f32 %v1470, %v187
        %v1473 = vmul.f32 %v1470, %v188
        %v1477 = vrot.slane %v1471, 5
        %v1478 = vrot.slane %v1472, 5
        %v1479 = vsel %vm719, %v1477, %v1478
        %v1480 = vrot.slane %v1473, 5
        %v1481 = vsel %vm719, %v1478, %v1480
        %v1484 = vadd.f32 %v1365, %v1479
        %v1485 = vadd.f32 %v1366, %v1481
        %s1486 = sld [smem:[#allocation2 + $0x55]]
        %v1487 = vstv %s1486
        %v1488 = vmul.f32 %v1487, %v186
        %v1489 = vmul.f32 %v1487, %v187
        %v1490 = vmul.f32 %v1487, %v188
        %v1494 = vrot.slane %v1488, 5
        %v1495 = vrot.slane %v1489, 5
        %v1496 = vsel %vm719, %v1494, %v1495
        %v1497 = vrot.slane %v1490, 5
        %v1498 = vsel %vm719, %v1495, %v1497
        %v1501 = vadd.f32 %v1382, %v1496
        %v1502 = vadd.f32 %v1383, %v1498
        %s1503 = sld [smem:[#allocation2 + $0x56]]
        %v1504 = vstv %s1503
        %v1505 = vmul.f32 %v1504, %v186
        %v1506 = vmul.f32 %v1504, %v187
        %v1507 = vmul.f32 %v1504, %v188
        %v1511 = vrot.slane %v1505, 5
        %v1512 = vrot.slane %v1506, 5
        %v1513 = vsel %vm719, %v1511, %v1512
        %v1514 = vrot.slane %v1507, 5
        %v1515 = vsel %vm719, %v1512, %v1514
        %v1518 = vadd.f32 %v1399, %v1513
        %v1519 = vadd.f32 %v1400, %v1515
        %s1520 = sld [smem:[#allocation2 + $0x57]]
        %v1521 = vstv %s1520
        %v1522 = vmul.f32 %v1521, %v186
        %v1523 = vmul.f32 %v1521, %v187
        %v1524 = vmul.f32 %v1521, %v188
        %v1528 = vrot.slane %v1522, 5
        %v1529 = vrot.slane %v1523, 5
        %v1530 = vsel %vm719, %v1528, %v1529
        %v1531 = vrot.slane %v1524, 5
        %v1532 = vsel %vm719, %v1529, %v1531
        %v1535 = vadd.f32 %v1416, %v1530
        %v1536 = vadd.f32 %v1417, %v1532
        %s1537 = sld [smem:[#allocation2 + $0x58]]
        %v1538 = vstv %s1537
        %v1539 = vmul.f32 %v1538, %v186
        %v1540 = vmul.f32 %v1538, %v187
        %v1541 = vmul.f32 %v1538, %v188
        %v1545 = vrot.slane %v1539, 5
        %v1546 = vrot.slane %v1540, 5
        %v1547 = vsel %vm719, %v1545, %v1546
        %v1548 = vrot.slane %v1541, 5
        %v1549 = vsel %vm719, %v1546, %v1548
        %v1552 = vadd.f32 %v1433, %v1547
        %v1553 = vadd.f32 %v1434, %v1549
        %s1554 = sld [smem:[#allocation2 + $0x59]]
        %v1555 = vstv %s1554
        %v1556 = vmul.f32 %v1555, %v186
        %v1557 = vmul.f32 %v1555, %v187
        %v1558 = vmul.f32 %v1555, %v188
        %v1562 = vrot.slane %v1556, 5
        %v1563 = vrot.slane %v1557, 5
        %v1564 = vsel %vm719, %v1562, %v1563
        %v1565 = vrot.slane %v1558, 5
        %v1566 = vsel %vm719, %v1563, %v1565
        %v1569 = vadd.f32 %v1450, %v1564
        %v1570 = vadd.f32 %v1451, %v1566
        %s1571 = sld [smem:[#allocation2 + $0x5a]]
        %v1572 = vstv %s1571
        %v1573 = vmul.f32 %v1572, %v186
        %v1574 = vmul.f32 %v1572, %v187
        %v1575 = vmul.f32 %v1572, %v188
        %v1579 = vrot.slane %v1573, 5
        %v1580 = vrot.slane %v1574, 5
        %v1581 = vsel %vm719, %v1579, %v1580
        %v1582 = vrot.slane %v1575, 5
        %v1583 = vsel %vm719, %v1580, %v1582
        %v1586 = vadd.f32 %v1467, %v1581
        %v1587 = vadd.f32 %v1468, %v1583
        %s1588 = sld [smem:[#allocation2 + $0x5b]]
        %v1589 = vstv %s1588
        %v1590 = vmul.f32 %v1589, %v186
        %v1591 = vmul.f32 %v1589, %v187
        %v1592 = vmul.f32 %v1589, %v188
        %v1596 = vrot.slane %v1590, 6
        %v1597 = vrot.slane %v1591, 6
        %v1598 = vsel %vm839, %v1596, %v1597
        %v1599 = vrot.slane %v1592, 6
        %v1600 = vsel %vm839, %v1597, %v1599
        %v1603 = vadd.f32 %v1484, %v1598
        %v1604 = vadd.f32 %v1485, %v1600
        %s1605 = sld [smem:[#allocation2 + $0x5c]]
        %v1606 = vstv %s1605
        %v1607 = vmul.f32 %v1606, %v186
        %v1608 = vmul.f32 %v1606, %v187
        %v1609 = vmul.f32 %v1606, %v188
        %v1613 = vrot.slane %v1607, 6
        %v1614 = vrot.slane %v1608, 6
        %v1615 = vsel %vm839, %v1613, %v1614
        %v1616 = vrot.slane %v1609, 6
        %v1617 = vsel %vm839, %v1614, %v1616
        %v1620 = vadd.f32 %v1501, %v1615
        %v1621 = vadd.f32 %v1502, %v1617
        %s1622 = sld [smem:[#allocation2 + $0x5d]]
        %v1623 = vstv %s1622
        %v1624 = vmul.f32 %v1623, %v186
        %v1625 = vmul.f32 %v1623, %v187
        %v1626 = vmul.f32 %v1623, %v188
        %v1630 = vrot.slane %v1624, 6
        %v1631 = vrot.slane %v1625, 6
        %v1632 = vsel %vm839, %v1630, %v1631
        %v1633 = vrot.slane %v1626, 6
        %v1634 = vsel %vm839, %v1631, %v1633
        %v1637 = vadd.f32 %v1518, %v1632
        %v1638 = vadd.f32 %v1519, %v1634
        %s1639 = sld [smem:[#allocation2 + $0x5e]]
        %v1640 = vstv %s1639
        %v1641 = vmul.f32 %v1640, %v186
        %v1642 = vmul.f32 %v1640, %v187
        %v1643 = vmul.f32 %v1640, %v188
        %v1647 = vrot.slane %v1641, 6
        %v1648 = vrot.slane %v1642, 6
        %v1649 = vsel %vm839, %v1647, %v1648
        %v1650 = vrot.slane %v1643, 6
        %v1651 = vsel %vm839, %v1648, %v1650
        %v1654 = vadd.f32 %v1535, %v1649
        %v1655 = vadd.f32 %v1536, %v1651
        %s1656 = sld [smem:[#allocation2 + $0x5f]]
        %v1657 = vstv %s1656
        %v1658 = vmul.f32 %v1657, %v186
        %v1659 = vmul.f32 %v1657, %v187
        %v1660 = vmul.f32 %v1657, %v188
        %v1664 = vrot.slane %v1658, 6
        %v1665 = vrot.slane %v1659, 6
        %v1666 = vsel %vm839, %v1664, %v1665
        %v1667 = vrot.slane %v1660, 6
        %v1668 = vsel %vm839, %v1665, %v1667
        %v1671 = vadd.f32 %v1552, %v1666
        %v1672 = vadd.f32 %v1553, %v1668
        %s1673 = sld [smem:[#allocation2 + $0x60]]
        %v1674 = vstv %s1673
        %v1675 = vmul.f32 %v1674, %v186
        %v1676 = vmul.f32 %v1674, %v187
        %v1677 = vmul.f32 %v1674, %v188
        %v1681 = vrot.slane %v1675, 6
        %v1682 = vrot.slane %v1676, 6
        %v1683 = vsel %vm839, %v1681, %v1682
        %v1684 = vrot.slane %v1677, 6
        %v1685 = vsel %vm839, %v1682, %v1684
        %v1688 = vadd.f32 %v1569, %v1683
        %v1689 = vadd.f32 %v1570, %v1685
        %s1690 = sld [smem:[#allocation2 + $0x61]]
        %v1691 = vstv %s1690
        %v1692 = vmul.f32 %v1691, %v186
        %v1693 = vmul.f32 %v1691, %v187
        %v1694 = vmul.f32 %v1691, %v188
        %v1698 = vrot.slane %v1692, 6
        %v1699 = vrot.slane %v1693, 6
        %v1700 = vsel %vm839, %v1698, %v1699
        %v1701 = vrot.slane %v1694, 6
        %v1702 = vsel %vm839, %v1699, %v1701
        %v1705 = vadd.f32 %v1586, %v1700
        %v1706 = vadd.f32 %v1587, %v1702
        %1709 = vrot.lane.b32.xlu0 %v1620, 127
        %v1710 = vpop.permute.xlu0 %1709
        %1711 = vrot.lane.b32.xlu0 %v1621, 127
        %v1712 = vpop.permute.xlu0 %1711
        %v1715 = vadd.f32 %v1603, %v1710
        %v1716 = vadd.f32 %v1604, %v1712
        %1719 = vrot.lane.b32.xlu0 %v1637, 126
        %v1720 = vpop.permute.xlu0 %1719
        %1721 = vrot.lane.b32.xlu0 %v1638, 126
        %v1722 = vpop.permute.xlu0 %1721
        %v1725 = vadd.f32 %v1715, %v1720
        %v1726 = vadd.f32 %v1716, %v1722
        %1729 = vrot.lane.b32.xlu0 %v1654, 125
        %v1730 = vpop.permute.xlu0 %1729
        %1731 = vrot.lane.b32.xlu0 %v1655, 125
        %v1732 = vpop.permute.xlu0 %1731
        %v1735 = vadd.f32 %v1725, %v1730
        %v1736 = vadd.f32 %v1726, %v1732
        %1739 = vrot.lane.b32.xlu0 %v1671, 124
        %v1740 = vpop.permute.xlu0 %1739
        %1741 = vrot.lane.b32.xlu0 %v1672, 124
        %v1742 = vpop.permute.xlu0 %1741
        %v1745 = vadd.f32 %v1735, %v1740
        %v1746 = vadd.f32 %v1736, %v1742
        %1749 = vrot.lane.b32.xlu0 %v1688, 123
        %v1750 = vpop.permute.xlu0 %1749
        %1751 = vrot.lane.b32.xlu0 %v1689, 123
        %v1752 = vpop.permute.xlu0 %1751
        %v1755 = vadd.f32 %v1745, %v1750
        %v1756 = vadd.f32 %v1746, %v1752
        %1759 = vrot.lane.b32.xlu0 %v1705, 122
        %v1760 = vpop.permute.xlu0 %1759
        %1761 = vrot.lane.b32.xlu0 %v1706, 122
        %v1762 = vpop.permute.xlu0 %1761
        %v1765 = vadd.f32 %v1755, %v1760
        %v1766 = vadd.f32 %v1756, %v1762
        %vm1767 = vcmask 130048
        %1768 = vst.msk [vmem:[%s150] sm:$0xff] %vm1767, %v1765
        %1769 = vst.msk [vmem:[%s150 + $0x8] sm:$0xff] %vm1767, %v1766
        %s1770 = sand.u32 %s72, 1
        %s1771 = scalar_lea.sflag [#allocation3], %s1770
        %s1772 = sand.u32 %s72, 1
        %s1773 = smul.addr %s1772, 16
        %s1774 = scalar_lea.vmem [#allocation5], %s1773
        // Predicated region
        $region33: #{tpu_custom_call.1} parent=27 // pred_check
          %p1775 = pneg %p82
        $region34: #{tpu_custom_call.1} parent=27 // pred_check_branch
          %1777 = sbr.rel (%p1775) target = $region36
        $region35: #{tpu_custom_call.1} parent=27 // pred_region
          %s1779 = ssub.s32 256, 256
          %1780 = vsyncadd %s1771, %s1779
          %s1781 = smul.addr %s17, 2
          %s1782 = smul.addr %s1781, 128
          %s1783 = scalar_lea.hbm %s2, %s1782
          %s1784 = sshll.u32 %s1774, 4
          %s1785 = int_to_ptr.vmem [resolvable:$true] %s1784
          %1790 = dma.vmem_to_hbm [thread:$0]  %s1785, 256, %s1783, %s1771, 128, 128, 8
        $region36: #{tpu_custom_call.1} parent=27 // pred_fallthru
          _
      $region28: #{tpu_custom_call.1} parent=5 // pred_fallthru
        _
      %p1791 = scmp.le.s32.totalorder 2, %s12
      // Predicated region
      $region37: #{tpu_custom_call.1} parent=5 // pred_check
        %p1792 = pneg %p1791
      $region38: #{tpu_custom_call.1} parent=5 // pred_check_branch
        %1794 = sbr.rel (%p1792) target = $region40
      $region39: #{tpu_custom_call.1} parent=5 // pred_region
        %s1795 = ssub.s32 %s12, 2
        // Predicated region
        $region41: #{tpu_custom_call.1} parent=39 // pred_check
          %p1796 = pneg %p88
        $region42: #{tpu_custom_call.1} parent=39 // pred_check_branch
          %1798 = sbr.rel (%p1796) target = $region44
        $region43: #{tpu_custom_call.1} parent=39 // pred_region
          %s1799 = sand.u32 %s73, 1
          %s1800 = scalar_lea.sflag [#allocation3], %s1799
          %s1801 = sand.u32 %s73, 1
          %s1802 = smul.addr %s1801, 16
          %s1803 = scalar_lea.vmem [#allocation5], %s1802
          %1804 = dma.done %s1800, 256
        $region44: #{tpu_custom_call.1} parent=39 // pred_fallthru
          _
      $region40: #{tpu_custom_call.1} parent=5 // pred_fallthru
        _
    $region6: #{tpu_custom_call.1} parent=1 // loop_footer
      %s16 = sadd.s32 1, %s12
    $region7: #{tpu_custom_call.1} parent=1 // loop_footer_branch
      %11 = sbr.rel target = $region3
    $region8: #{tpu_custom_call.1} parent=1 // loop_exit
      _
    %1805 = vsyncpa [#allocation3], 1
    %s1806 = scalar_lea.sflag [#allocation3], 1
    %1807 = vsyncpa %s1806, 1
    %1808 = vsyncpa [#allocation4], 1
    %s1809 = scalar_lea.sflag [#allocation4], 1
    %1810 = vsyncpa %s1809, 1

</llo_original>
